<compile_context>
chip_gen: v5e
topology: v5e:2x2
jax: 0.10.0
libtpu: 0.0.40
codegen_flags: <defaults>
</compile_context>

<pallas_src>
import functools

import jax
import jax.numpy as jnp
from jax import lax
from jax.experimental import pallas as pl
from jax.experimental.pallas import tpu as pltpu


def bottleneck_kernel(x_ref, w1_ref, w2_ref, w3_ref, b1_ref, b2_ref, b3_ref,
                      o_ref, *, H, W, Cin, Cmid, Cout):
    HW = H * W
    bf16 = jnp.bfloat16
    f32 = jnp.float32

    # Lane-dense input slab for this image: (H, W*Cin), element (h, w*Cin + c).
    xin = x_ref[0]

    # Manual relayout to the flattened matmul domain (H*W, Cin) with w-major
    # pixel index p = w*H + h, built from W static lane-slices + one concat
    # (no tile-crossing reshape needed).
    x_mat = jnp.concatenate(
        [xin[:, w * Cin:(w + 1) * Cin] for w in range(W)], axis=0)

    # ---- conv1 (1x1) + folded bn1 + relu: one bf16 MXU matmul, f32 accum ----
    h1 = jnp.dot(x_mat.astype(bf16), w1_ref[...], preferred_element_type=f32)
    h1 = jnp.maximum(h1 + b1_ref[...], 0.0)                      # (HW, Cmid) f32

    # ---- conv2 (3x3, stride 1, pad 1) as ONE im2col matmul ------------------
    # Tap (ky, kx) of output pixel p = w*H + h needs input pixel index
    # p + (kx-1)*H + (ky-1).  A flat zero pad of H+1 rows on each side absorbs
    # every out-of-range w-neighbour; out-of-range h-neighbours (which would
    # otherwise wrap into the adjacent column) are killed with two masks.
    zpad = jnp.zeros((H + 1, Cmid), f32)
    hp = jnp.concatenate([zpad, h1, zpad], axis=0)               # (HW + 2H + 2, Cmid)
    hh = lax.broadcasted_iota(jnp.int32, (HW, Cmid), 0) % H      # inner (h) coord
    not_top = hh >= 1          # rows where the dy = -1 neighbour exists
    not_bot = hh <= H - 2      # rows where the dy = +1 neighbour exists

    cols = []
    for ky in range(3):                      # dy = ky - 1
        for kx in range(3):                  # dx = kx - 1
            off = (kx - 1) * H + (ky - 1)    # flat shift in the w-major layout
            tap = hp[(H + 1) + off:(H + 1) + off + HW, :]        # static slice
            if ky == 0:
                tap = jnp.where(not_top, tap, 0.0)
            elif ky == 2:
                tap = jnp.where(not_bot, tap, 0.0)
            cols.append(tap)
    a = jnp.concatenate(cols, axis=-1)                           # (HW, 9*Cmid)

    h2 = jnp.dot(a.astype(bf16), w2_ref[...], preferred_element_type=f32)
    h2 = jnp.maximum(h2 + b2_ref[...], 0.0)                      # (HW, Cmid) f32

    # ---- conv3 (1x1), bn3 scale pre-folded into the weight ------------------
    h3 = jnp.dot(h2.astype(bf16), w3_ref[...], preferred_element_type=f32)
    h3 = h3 + b3_ref[...]                                        # (HW, Cout) f32

    # ---- residual add + relu in the lane-dense (H, W*Cout) output layout ----
    # Aligned row-slices (offsets are multiples of H) + one lane concat; the
    # residual x is added directly in its native lane-dense layout.
    out2d = jnp.concatenate(
        [h3[w * H:(w + 1) * H, :] for w in range(W)], axis=1)    # (H, W*Cout)
    o_ref[0] = jnp.maximum(out2d + xin, 0.0).astype(o_ref.dtype)


def bottleneck_pallas(x_nhwc, w1, w2, w3, b1, b2, b3):
    """x_nhwc f32 (N,H,W,Cin); w1 (Cin,Cmid), w2 (9*Cmid,Cmid), w3 (Cmid,Cout)
    in bf16 with BN scales folded in; b1,b2 (1,Cmid) f32; b3 (1,Cout) f32."""
    N, H, W, Cin = x_nhwc.shape
    Cmid = w1.shape[1]
    Cout = w3.shape[1]
    assert Cout == Cin, "fused residual path requires Cin == expansion * Cmid"

    x_slab = x_nhwc.reshape(N, H, W * Cin)     # lane-dense I/O slab (W*Cin = 256)
    kernel = functools.partial(bottleneck_kernel, H=H, W=W, Cin=Cin,
                               Cmid=Cmid, Cout=Cout)
    full = lambda shape: pl.BlockSpec(shape, lambda b: (0,) * len(shape))

    out_slab = pl.pallas_call(
        kernel,
        out_shape=jax.ShapeDtypeStruct((N, H, W * Cout), x_nhwc.dtype),
        grid_spec=pltpu.PrefetchScalarGridSpec(
            num_scalar_prefetch=0,
            grid=(N,),
            in_specs=[
                pl.BlockSpec((1, H, W * Cin), lambda b: (b, 0, 0)),
                full((Cin, Cmid)),
                full((9 * Cmid, Cmid)),
                full((Cmid, Cout)),
                full((1, Cmid)), full((1, Cmid)), full((1, Cout)),
            ],
            out_specs=pl.BlockSpec((1, H, W * Cout), lambda b: (b, 0, 0)),
        ),
        compiler_params=pltpu.CompilerParams(
            dimension_semantics=("parallel",)),
    )(x_slab, w1, w2, w3, b1, b2, b3)
    return out_slab.reshape(N, H, W, Cout)


# -------------------- pure-JAX reference (NHWC, mirrored bf16 casts) ----------
def bottleneck_ref(x_nhwc, w1f_hwio, w2f_hwio, w3f_hwio, b1, b2, b3):
    conv = functools.partial(lax.conv_general_dilated, window_strides=(1, 1),
                             dimension_numbers=('NHWC', 'HWIO', 'NHWC'),
                             preferred_element_type=jnp.float32)
    h = conv(x_nhwc.astype(jnp.bfloat16), w1f_hwio, padding='VALID')
    h = jnp.maximum(h + b1, 0.0)
    h = conv(h.astype(jnp.bfloat16), w2f_hwio, padding=((1, 1), (1, 1)))
    h = jnp.maximum(h + b2, 0.0)
    h = conv(h.astype(jnp.bfloat16), w3f_hwio, padding='VALID')
    h = h + b3
    return jnp.maximum(h + x_nhwc, 0.0)


def fold_bn(gamma, beta, mean, var, eps=1e-5):
    scale = gamma / jnp.sqrt(var + eps)
    bias = beta - mean * scale
    return scale.astype(jnp.float32), bias.astype(jnp.float32)


if __name__ == "__main__":
    # BottleNeck(input=16, output=4): Cin=16, Cmid=4, Cout=16, stride=1, no downsample.
    N, H, W = 2, 16, 16
    Cmid = 4
    Cin = Cout = Cmid * 4     # expansion = 4

    key = jax.random.PRNGKey(0)
    kx, k1, k2, k3 = jax.random.split(key, 4)

    # Module input is NCHW; the kernel works on NHWC-derived lane-dense slabs.
    x_nchw = jax.random.normal(kx, (N, Cin, H, W), jnp.float32)
    x_nhwc = jnp.transpose(x_nchw, (0, 2, 3, 1))

    # Deterministic conv weights (HWIO; PyTorch OIHW maps via transpose).
    w1_hwio = 0.2 * jax.random.normal(k1, (1, 1, Cin, Cmid), jnp.float32)
    w2_hwio = 0.2 * jax.random.normal(k2, (3, 3, Cmid, Cmid), jnp.float32)
    w3_hwio = 0.2 * jax.random.normal(k3, (1, 1, Cmid, Cout), jnp.float32)

    # Deterministic eval-mode BatchNorm parameters, folded to scale/bias.
    def bn_params(c):
        r = jnp.arange(c, dtype=jnp.float32)
        return fold_bn(1.0 + 0.01 * r, 0.002 * r, 0.003 * r, 1.0 + 0.005 * r)

    s1, b1 = bn_params(Cmid)
    s2, b2 = bn_params(Cmid)
    s3, b3 = bn_params(Cout)

    # Fold BN scales into the conv weights (exact in f32), then cast to bf16 once.
    w1f_hwio = (w1_hwio * s1).astype(jnp.bfloat16)
    w2f_hwio = (w2_hwio * s2).astype(jnp.bfloat16)
    w3f_hwio = (w3_hwio * s3).astype(jnp.bfloat16)

    out = bottleneck_pallas(
        x_nhwc,
        w1f_hwio.reshape(Cin, Cmid),
        w2f_hwio.reshape(9 * Cmid, Cmid),   # rows ordered (ky*3+kx)*Cmid + ci
        w3f_hwio.reshape(Cmid, Cout),
        b1.reshape(1, Cmid), b2.reshape(1, Cmid), b3.reshape(1, Cout),
    )
    out = jax.block_until_ready(out)

    ref = bottleneck_ref(x_nhwc, w1f_hwio, w2f_hwio, w3f_hwio, b1, b2, b3)
    ref = jax.block_until_ready(ref)

    assert out.shape == (N, H, W, Cout)
    max_err = float(jnp.max(jnp.abs(out - ref)))
    assert jnp.allclose(out, ref, rtol=2e-3, atol=2e-3), max_err

    print("KERNEL_OK")
</pallas_src>

<mosaic_0001>
module attributes {stable_mosaic.version = 11 : i64} {
  func.func @bottleneck_kernel(%arg0: i32, %arg1: memref<1x16x256xf32, #tpu.memory_space<vmem>>, %arg2: memref<16x4xbf16, #tpu.memory_space<vmem>>, %arg3: memref<36x4xbf16, #tpu.memory_space<vmem>>, %arg4: memref<4x16xbf16, #tpu.memory_space<vmem>>, %arg5: memref<1x4xf32, #tpu.memory_space<vmem>>, %arg6: memref<1x4xf32, #tpu.memory_space<vmem>>, %arg7: memref<1x16xf32, #tpu.memory_space<vmem>>, %arg8: memref<1x16x256xf32, #tpu.memory_space<vmem>>) attributes {dimension_semantics = [#tpu.dimension_semantics<parallel>], iteration_bounds = array<i64: 2>, scalar_prefetch = 0 : i64, scratch_operands = 0 : i64, tpu.core_type = #tpu.core_type<tc>, window_params = [{transform_indices = @transform_0, window_bounds = array<i64: 1, 16, 256>}, {pipeline_mode = #tpu.pipeline_mode<synchronous>, transform_indices = @transform_1, window_bounds = array<i64: 16, 4>}, {pipeline_mode = #tpu.pipeline_mode<synchronous>, transform_indices = @transform_2, window_bounds = array<i64: 36, 4>}, {pipeline_mode = #tpu.pipeline_mode<synchronous>, transform_indices = @transform_3, window_bounds = array<i64: 4, 16>}, {pipeline_mode = #tpu.pipeline_mode<synchronous>, transform_indices = @transform_4, window_bounds = array<i64: 1, 4>}, {pipeline_mode = #tpu.pipeline_mode<synchronous>, transform_indices = @transform_5, window_bounds = array<i64: 1, 4>}, {pipeline_mode = #tpu.pipeline_mode<synchronous>, transform_indices = @transform_6, window_bounds = array<i64: 1, 16>}, {transform_indices = @transform_7, window_bounds = array<i64: 1, 16, 256>}]} {
    %c0 = arith.constant 0 : index
    %c0_0 = arith.constant 0 : index
    %c0_1 = arith.constant 0 : index
    %0 = vector.load %arg1[%c0, %c0_0, %c0_1] : memref<1x16x256xf32, #tpu.memory_space<vmem>>, vector<1x16x256xf32>
    %1 = vector.shape_cast %0 : vector<1x16x256xf32> to vector<16x256xf32>
    %2 = vector.extract_strided_slice %1 {offsets = [0, 0], sizes = [16, 16], strides = [1, 1]} : vector<16x256xf32> to vector<16x16xf32>
    %3 = vector.extract_strided_slice %1 {offsets = [0, 16], sizes = [16, 16], strides = [1, 1]} : vector<16x256xf32> to vector<16x16xf32>
    %4 = vector.extract_strided_slice %1 {offsets = [0, 32], sizes = [16, 16], strides = [1, 1]} : vector<16x256xf32> to vector<16x16xf32>
    %5 = vector.extract_strided_slice %1 {offsets = [0, 48], sizes = [16, 16], strides = [1, 1]} : vector<16x256xf32> to vector<16x16xf32>
    %6 = vector.extract_strided_slice %1 {offsets = [0, 64], sizes = [16, 16], strides = [1, 1]} : vector<16x256xf32> to vector<16x16xf32>
    %7 = vector.extract_strided_slice %1 {offsets = [0, 80], sizes = [16, 16], strides = [1, 1]} : vector<16x256xf32> to vector<16x16xf32>
    %8 = vector.extract_strided_slice %1 {offsets = [0, 96], sizes = [16, 16], strides = [1, 1]} : vector<16x256xf32> to vector<16x16xf32>
    %9 = vector.extract_strided_slice %1 {offsets = [0, 112], sizes = [16, 16], strides = [1, 1]} : vector<16x256xf32> to vector<16x16xf32>
    %10 = vector.extract_strided_slice %1 {offsets = [0, 128], sizes = [16, 16], strides = [1, 1]} : vector<16x256xf32> to vector<16x16xf32>
    %11 = vector.extract_strided_slice %1 {offsets = [0, 144], sizes = [16, 16], strides = [1, 1]} : vector<16x256xf32> to vector<16x16xf32>
    %12 = vector.extract_strided_slice %1 {offsets = [0, 160], sizes = [16, 16], strides = [1, 1]} : vector<16x256xf32> to vector<16x16xf32>
    %13 = vector.extract_strided_slice %1 {offsets = [0, 176], sizes = [16, 16], strides = [1, 1]} : vector<16x256xf32> to vector<16x16xf32>
    %14 = vector.extract_strided_slice %1 {offsets = [0, 192], sizes = [16, 16], strides = [1, 1]} : vector<16x256xf32> to vector<16x16xf32>
    %15 = vector.extract_strided_slice %1 {offsets = [0, 208], sizes = [16, 16], strides = [1, 1]} : vector<16x256xf32> to vector<16x16xf32>
    %16 = vector.extract_strided_slice %1 {offsets = [0, 224], sizes = [16, 16], strides = [1, 1]} : vector<16x256xf32> to vector<16x16xf32>
    %17 = vector.extract_strided_slice %1 {offsets = [0, 240], sizes = [16, 16], strides = [1, 1]} : vector<16x256xf32> to vector<16x16xf32>
    %18 = tpu.concatenate %2, %3, %4, %5, %6, %7, %8, %9, %10, %11, %12, %13, %14, %15, %16, %17 in 0 : vector<16x16xf32>, vector<16x16xf32>, vector<16x16xf32>, vector<16x16xf32>, vector<16x16xf32>, vector<16x16xf32>, vector<16x16xf32>, vector<16x16xf32>, vector<16x16xf32>, vector<16x16xf32>, vector<16x16xf32>, vector<16x16xf32>, vector<16x16xf32>, vector<16x16xf32>, vector<16x16xf32>, vector<16x16xf32> -> vector<256x16xf32>
    %19 = arith.truncf %18 : vector<256x16xf32> to vector<256x16xbf16>
    %c0_2 = arith.constant 0 : index
    %c0_3 = arith.constant 0 : index
    %20 = vector.load %arg2[%c0_2, %c0_3] : memref<16x4xbf16, #tpu.memory_space<vmem>>, vector<16x4xbf16>
    %cst = arith.constant dense<0.000000e+00> : vector<256x4xf32>
    %21 = tpu.matmul %19, %20, %cst {dimension_numbers = #tpu.dot_dimension_numbers<[1], [0], [0], [1], [0, 0, 1, 1], [], []>} : vector<256x16xbf16>, vector<16x4xbf16>, vector<256x4xf32> -> vector<256x4xf32>
    %c0_4 = arith.constant 0 : index
    %c0_5 = arith.constant 0 : index
    %22 = vector.load %arg5[%c0_4, %c0_5] : memref<1x4xf32, #tpu.memory_space<vmem>>, vector<1x4xf32>
    %23 = vector.broadcast %22 : vector<1x4xf32> to vector<256x4xf32>
    %24 = arith.addf %21, %23 : vector<256x4xf32>
    %cst_6 = arith.constant 0.000000e+00 : f32
    %25 = vector.broadcast %cst_6 : f32 to vector<256x4xf32>
    %26 = arith.maximumf %24, %25 : vector<256x4xf32>
    %cst_7 = arith.constant 0.000000e+00 : f32
    %27 = vector.broadcast %cst_7 : f32 to vector<17x4xf32>
    %28 = tpu.concatenate %27, %26, %27 in 0 : vector<17x4xf32>, vector<256x4xf32>, vector<17x4xf32> -> vector<290x4xf32>
    %29 = tpu.iota {dimensions = array<i32: 0>} : vector<256x4xi32>
    %c16_i32 = arith.constant 16 : i32
    %c0_i32 = arith.constant 0 : i32
    %30 = arith.cmpi eq, %c16_i32, %c0_i32 : i32
    %c1_i32 = arith.constant 1 : i32
    %31 = arith.select %30, %c1_i32, %c16_i32 : i32
    %32 = vector.broadcast %31 : i32 to vector<256x4xi32>
    %33 = arith.remsi %29, %32 : vector<256x4xi32>
    %c0_i32_8 = arith.constant 0 : i32
    %34 = vector.broadcast %c0_i32_8 : i32 to vector<256x4xi32>
    %35 = arith.cmpi ne, %33, %34 : vector<256x4xi32>
    %c0_i32_9 = arith.constant 0 : i32
    %36 = vector.broadcast %c0_i32_9 : i32 to vector<256x4xi32>
    %37 = arith.cmpi slt, %33, %36 : vector<256x4xi32>
    %c0_i32_10 = arith.constant 0 : i32
    %38 = arith.cmpi slt, %31, %c0_i32_10 : i32
    %39 = vector.broadcast %38 : i1 to vector<256x4xi1>
    %40 = vector.broadcast %39 : vector<256x4xi1> to vector<256x4xi1>
    %41 = arith.xori %37, %40 : vector<256x4xi1>
    %42 = arith.andi %41, %35 : vector<256x4xi1>
    %43 = vector.broadcast %31 : i32 to vector<256x4xi32>
    %44 = arith.addi %33, %43 : vector<256x4xi32>
    %45 = arith.select %42, %44, %33 : vector<256x4xi1>, vector<256x4xi32>
    %c1_i32_11 = arith.constant 1 : i32
    %46 = vector.broadcast %c1_i32_11 : i32 to vector<256x4xi32>
    %47 = arith.cmpi sge, %45, %46 : vector<256x4xi32>
    %c14_i32 = arith.constant 14 : i32
    %48 = vector.broadcast %c14_i32 : i32 to vector<256x4xi32>
    %49 = arith.cmpi sle, %45, %48 : vector<256x4xi32>
    %50 = vector.extract_strided_slice %28 {offsets = [0, 0], sizes = [256, 4], strides = [1, 1]} : vector<290x4xf32> to vector<256x4xf32>
    %cst_12 = arith.constant 0.000000e+00 : f32
    %51 = vector.broadcast %cst_12 : f32 to vector<256x4xf32>
    %52 = arith.select %47, %50, %51 : vector<256x4xi1>, vector<256x4xf32>
    %53 = vector.extract_strided_slice %28 {offsets = [16, 0], sizes = [256, 4], strides = [1, 1]} : vector<290x4xf32> to vector<256x4xf32>
    %cst_13 = arith.constant 0.000000e+00 : f32
    %54 = vector.broadcast %cst_13 : f32 to vector<256x4xf32>
    %55 = arith.select %47, %53, %54 : vector<256x4xi1>, vector<256x4xf32>
    %56 = vector.extract_strided_slice %28 {offsets = [32, 0], sizes = [256, 4], strides = [1, 1]} : vector<290x4xf32> to vector<256x4xf32>
    %cst_14 = arith.constant 0.000000e+00 : f32
    %57 = vector.broadcast %cst_14 : f32 to vector<256x4xf32>
    %58 = arith.select %47, %56, %57 : vector<256x4xi1>, vector<256x4xf32>
    %59 = vector.extract_strided_slice %28 {offsets = [1, 0], sizes = [256, 4], strides = [1, 1]} : vector<290x4xf32> to vector<256x4xf32>
    %60 = vector.extract_strided_slice %28 {offsets = [17, 0], sizes = [256, 4], strides = [1, 1]} : vector<290x4xf32> to vector<256x4xf32>
    %61 = vector.extract_strided_slice %28 {offsets = [33, 0], sizes = [256, 4], strides = [1, 1]} : vector<290x4xf32> to vector<256x4xf32>
    %62 = vector.extract_strided_slice %28 {offsets = [2, 0], sizes = [256, 4], strides = [1, 1]} : vector<290x4xf32> to vector<256x4xf32>
    %cst_15 = arith.constant 0.000000e+00 : f32
    %63 = vector.broadcast %cst_15 : f32 to vector<256x4xf32>
    %64 = arith.select %49, %62, %63 : vector<256x4xi1>, vector<256x4xf32>
    %65 = vector.extract_strided_slice %28 {offsets = [18, 0], sizes = [256, 4], strides = [1, 1]} : vector<290x4xf32> to vector<256x4xf32>
    %cst_16 = arith.constant 0.000000e+00 : f32
    %66 = vector.broadcast %cst_16 : f32 to vector<256x4xf32>
    %67 = arith.select %49, %65, %66 : vector<256x4xi1>, vector<256x4xf32>
    %68 = vector.extract_strided_slice %28 {offsets = [34, 0], sizes = [256, 4], strides = [1, 1]} : vector<290x4xf32> to vector<256x4xf32>
    %cst_17 = arith.constant 0.000000e+00 : f32
    %69 = vector.broadcast %cst_17 : f32 to vector<256x4xf32>
    %70 = arith.select %49, %68, %69 : vector<256x4xi1>, vector<256x4xf32>
    %71 = tpu.concatenate %52, %55, %58, %59, %60, %61, %64, %67, %70 in 1 : vector<256x4xf32>, vector<256x4xf32>, vector<256x4xf32>, vector<256x4xf32>, vector<256x4xf32>, vector<256x4xf32>, vector<256x4xf32>, vector<256x4xf32>, vector<256x4xf32> -> vector<256x36xf32>
    %72 = arith.truncf %71 : vector<256x36xf32> to vector<256x36xbf16>
    %c0_18 = arith.constant 0 : index
    %c0_19 = arith.constant 0 : index
    %73 = vector.load %arg3[%c0_18, %c0_19] : memref<36x4xbf16, #tpu.memory_space<vmem>>, vector<36x4xbf16>
    %cst_20 = arith.constant dense<0.000000e+00> : vector<256x4xf32>
    %74 = tpu.matmul %72, %73, %cst_20 {dimension_numbers = #tpu.dot_dimension_numbers<[1], [0], [0], [1], [0, 0, 1, 1], [], []>} : vector<256x36xbf16>, vector<36x4xbf16>, vector<256x4xf32> -> vector<256x4xf32>
    %c0_21 = arith.constant 0 : index
    %c0_22 = arith.constant 0 : index
    %75 = vector.load %arg6[%c0_21, %c0_22] : memref<1x4xf32, #tpu.memory_space<vmem>>, vector<1x4xf32>
    %76 = vector.broadcast %75 : vector<1x4xf32> to vector<256x4xf32>
    %77 = arith.addf %74, %76 : vector<256x4xf32>
    %cst_23 = arith.constant 0.000000e+00 : f32
    %78 = vector.broadcast %cst_23 : f32 to vector<256x4xf32>
    %79 = arith.maximumf %77, %78 : vector<256x4xf32>
    %80 = arith.truncf %79 : vector<256x4xf32> to vector<256x4xbf16>
    %c0_24 = arith.constant 0 : index
    %c0_25 = arith.constant 0 : index
    %81 = vector.load %arg4[%c0_24, %c0_25] : memref<4x16xbf16, #tpu.memory_space<vmem>>, vector<4x16xbf16>
    %cst_26 = arith.constant dense<0.000000e+00> : vector<256x16xf32>
    %82 = tpu.matmul %80, %81, %cst_26 {dimension_numbers = #tpu.dot_dimension_numbers<[1], [0], [0], [1], [0, 0, 1, 1], [], []>} : vector<256x4xbf16>, vector<4x16xbf16>, vector<256x16xf32> -> vector<256x16xf32>
    %c0_27 = arith.constant 0 : index
    %c0_28 = arith.constant 0 : index
    %83 = vector.load %arg7[%c0_27, %c0_28] : memref<1x16xf32, #tpu.memory_space<vmem>>, vector<1x16xf32>
    %84 = vector.broadcast %83 : vector<1x16xf32> to vector<256x16xf32>
    %85 = arith.addf %82, %84 : vector<256x16xf32>
    %86 = vector.extract_strided_slice %85 {offsets = [0, 0], sizes = [16, 16], strides = [1, 1]} : vector<256x16xf32> to vector<16x16xf32>
    %87 = vector.extract_strided_slice %85 {offsets = [16, 0], sizes = [16, 16], strides = [1, 1]} : vector<256x16xf32> to vector<16x16xf32>
    %88 = vector.extract_strided_slice %85 {offsets = [32, 0], sizes = [16, 16], strides = [1, 1]} : vector<256x16xf32> to vector<16x16xf32>
    %89 = vector.extract_strided_slice %85 {offsets = [48, 0], sizes = [16, 16], strides = [1, 1]} : vector<256x16xf32> to vector<16x16xf32>
    %90 = vector.extract_strided_slice %85 {offsets = [64, 0], sizes = [16, 16], strides = [1, 1]} : vector<256x16xf32> to vector<16x16xf32>
    %91 = vector.extract_strided_slice %85 {offsets = [80, 0], sizes = [16, 16], strides = [1, 1]} : vector<256x16xf32> to vector<16x16xf32>
    %92 = vector.extract_strided_slice %85 {offsets = [96, 0], sizes = [16, 16], strides = [1, 1]} : vector<256x16xf32> to vector<16x16xf32>
    %93 = vector.extract_strided_slice %85 {offsets = [112, 0], sizes = [16, 16], strides = [1, 1]} : vector<256x16xf32> to vector<16x16xf32>
    %94 = vector.extract_strided_slice %85 {offsets = [128, 0], sizes = [16, 16], strides = [1, 1]} : vector<256x16xf32> to vector<16x16xf32>
    %95 = vector.extract_strided_slice %85 {offsets = [144, 0], sizes = [16, 16], strides = [1, 1]} : vector<256x16xf32> to vector<16x16xf32>
    %96 = vector.extract_strided_slice %85 {offsets = [160, 0], sizes = [16, 16], strides = [1, 1]} : vector<256x16xf32> to vector<16x16xf32>
    %97 = vector.extract_strided_slice %85 {offsets = [176, 0], sizes = [16, 16], strides = [1, 1]} : vector<256x16xf32> to vector<16x16xf32>
    %98 = vector.extract_strided_slice %85 {offsets = [192, 0], sizes = [16, 16], strides = [1, 1]} : vector<256x16xf32> to vector<16x16xf32>
    %99 = vector.extract_strided_slice %85 {offsets = [208, 0], sizes = [16, 16], strides = [1, 1]} : vector<256x16xf32> to vector<16x16xf32>
    %100 = vector.extract_strided_slice %85 {offsets = [224, 0], sizes = [16, 16], strides = [1, 1]} : vector<256x16xf32> to vector<16x16xf32>
    %101 = vector.extract_strided_slice %85 {offsets = [240, 0], sizes = [16, 16], strides = [1, 1]} : vector<256x16xf32> to vector<16x16xf32>
    %102 = tpu.concatenate %86, %87, %88, %89, %90, %91, %92, %93, %94, %95, %96, %97, %98, %99, %100, %101 in 1 : vector<16x16xf32>, vector<16x16xf32>, vector<16x16xf32>, vector<16x16xf32>, vector<16x16xf32>, vector<16x16xf32>, vector<16x16xf32>, vector<16x16xf32>, vector<16x16xf32>, vector<16x16xf32>, vector<16x16xf32>, vector<16x16xf32>, vector<16x16xf32>, vector<16x16xf32>, vector<16x16xf32>, vector<16x16xf32> -> vector<16x256xf32>
    %103 = arith.addf %102, %1 : vector<16x256xf32>
    %cst_29 = arith.constant 0.000000e+00 : f32
    %104 = vector.broadcast %cst_29 : f32 to vector<16x256xf32>
    %105 = arith.maximumf %103, %104 : vector<16x256xf32>
    %c0_30 = arith.constant 0 : index
    %c0_31 = arith.constant 0 : index
    %c0_32 = arith.constant 0 : index
    %106 = vector.load %arg8[%c0_30, %c0_31, %c0_32] : memref<1x16x256xf32, #tpu.memory_space<vmem>>, vector<1x16x256xf32>
    %107 = vector.shape_cast %106 : vector<1x16x256xf32> to vector<16x256xf32>
    %108 = vector.shape_cast %105 : vector<16x256xf32> to vector<1x16x256xf32>
    tpu.vector_store %arg8[%c0_30, %c0_31, %c0_32], %108 {strides = array<i32>} : memref<1x16x256xf32, #tpu.memory_space<vmem>>, vector<1x16x256xf32>,
    return
  }
  func.func @transform_0(%arg0: i32) -> (i32, i32, i32) {
    %c0_i32 = arith.constant 0 : i32
    %c0_i32_0 = arith.constant 0 : i32
    %c0_i32_1 = arith.constant 0 : i32
    return %arg0, %c0_i32, %c0_i32_0 : i32, i32, i32
  }
  func.func @transform_1(%arg0: i32) -> (i32, i32) {
    %c0_i32 = arith.constant 0 : i32
    %c0_i32_0 = arith.constant 0 : i32
    %c0_i32_1 = arith.constant 0 : i32
    return %c0_i32, %c0_i32_0 : i32, i32
  }
  func.func @transform_2(%arg0: i32) -> (i32, i32) {
    %c0_i32 = arith.constant 0 : i32
    %c0_i32_0 = arith.constant 0 : i32
    %c0_i32_1 = arith.constant 0 : i32
    return %c0_i32, %c0_i32_0 : i32, i32
  }
  func.func @transform_3(%arg0: i32) -> (i32, i32) {
    %c0_i32 = arith.constant 0 : i32
    %c0_i32_0 = arith.constant 0 : i32
    %c0_i32_1 = arith.constant 0 : i32
    return %c0_i32, %c0_i32_0 : i32, i32
  }
  func.func @transform_4(%arg0: i32) -> (i32, i32) {
    %c0_i32 = arith.constant 0 : i32
    %c0_i32_0 = arith.constant 0 : i32
    %c0_i32_1 = arith.constant 0 : i32
    return %c0_i32, %c0_i32_0 : i32, i32
  }
  func.func @transform_5(%arg0: i32) -> (i32, i32) {
    %c0_i32 = arith.constant 0 : i32
    %c0_i32_0 = arith.constant 0 : i32
    %c0_i32_1 = arith.constant 0 : i32
    return %c0_i32, %c0_i32_0 : i32, i32
  }
  func.func @transform_6(%arg0: i32) -> (i32, i32) {
    %c0_i32 = arith.constant 0 : i32
    %c0_i32_0 = arith.constant 0 : i32
    %c0_i32_1 = arith.constant 0 : i32
    return %c0_i32, %c0_i32_0 : i32, i32
  }
  func.func @transform_7(%arg0: i32) -> (i32, i32, i32) {
    %c0_i32 = arith.constant 0 : i32
    %c0_i32_0 = arith.constant 0 : i32
    %c0_i32_1 = arith.constant 0 : i32
    return %arg0, %c0_i32, %c0_i32_0 : i32, i32, i32
  }
}

</mosaic_0001>

<llo_original>
// kernel: tpu_custom_call.1
$region0: #{tpu_custom_call.1}
  #allocation0 [shape = 'u32[]', space=smem, size = 0x4, offset = 0x4, fixed_abs, tag = 'smem constant byte address 0x4 - core index']
  #allocation1 [shape = 'u32[72,128]{1,0:T(1,128)}', space=vmem, size = 0x9000, scoped, tag = 'internal scratch']
  %s0 = inlined_call_operand.hbm [shape: f32[2,16,256], index: 0, kind: input, shape index: {}]
  %s1 = inlined_call_operand.vmem [shape: bf16[16,4], index: 1, kind: input, shape index: {}]
  %s2 = inlined_call_operand.vmem [shape: bf16[36,4], index: 2, kind: input, shape index: {}]
  %s3 = inlined_call_operand.vmem [shape: bf16[4,16], index: 3, kind: input, shape index: {}]
  %s4 = inlined_call_operand.vmem [shape: f32[1,4], index: 4, kind: input, shape index: {}]
  %s5 = inlined_call_operand.vmem [shape: f32[1,4], index: 5, kind: input, shape index: {}]
  %s6 = inlined_call_operand.vmem [shape: f32[1,16], index: 6, kind: input, shape index: {}]
  %s7 = inlined_call_operand.hbm [shape: f32[2,16,256], index: 7, kind: output, shape index: {}]
  %s8 = sld [smem:[#allocation0]]
  $region65: #{tpu_custom_call.1} parent=0
    _
  %s10 = ssub.s32 1, %s8
  %s11 = scalar_select 0, %s10, %s8
  $region1: #{tpu_custom_call.1} parent=0
    #allocation2 [shape = 'u8[32768]{0}', space=vmem, size = 0x8000, scoped, tag = 'input window, operand 0']
    #allocation3 [shape = 's32[2]{0}', space=sflag, size = 0x8, scoped, tag = 'scoped memory for tpu_custom_call.1']
    #allocation4 [shape = 's32[2]{0}', space=sflag, size = 0x8, scoped, tag = 'scoped memory for tpu_custom_call.1']
    #allocation5 [shape = 'u8[32768]{0}', space=vmem, size = 0x8000, scoped, tag = 'output window, operand 0']
    %12 = vsyncpa [#allocation3], 0
    %s13 = scalar_lea.sflag [#allocation3], 1
    %14 = vsyncpa %s13, 0
    %15 = vsyncpa [#allocation4], 0
    %s16 = scalar_lea.sflag [#allocation4], 1
    %17 = vsyncpa %s16, 0
    loop: start=0, step=1, limit=4
    $region2: #{tpu_custom_call.1} parent=1 // loop_pre_header
      _
    $region3: #{tpu_custom_call.1} parent=1 // loop_header
      %s19 = sphi 0, %s23
      %p20 = scmp.ge.s32.totalorder %s19, 4
      %s29 = sphi 0, %s31
      %s32 = sphi 0, %s29
      %s33 = sphi 0, %s32
      %s49 = sphi 0, %s33
      %s53 = sphi 0, %s53
      %s55 = sphi 0, %s53
      %s56 = sphi 0, %s55
      %s70 = sphi 0, %s56
      %s74 = sphi 0, %s74
      %s76 = sphi 0, %s74
      %s77 = sphi 0, %s76
      %s91 = sphi 0, %s77
      %s95 = sphi 0, %s95
      %s97 = sphi 0, %s95
      %s98 = sphi 0, %s97
      %s112 = sphi 0, %s98
      %s116 = sphi 0, %s116
      %s118 = sphi 0, %s116
      %s119 = sphi 0, %s118
      %s133 = sphi 0, %s119
      %s137 = sphi 0, %s137
      %s139 = sphi 0, %s137
      %s140 = sphi 0, %s139
      %s154 = sphi 0, %s140
      %s158 = sphi 0, %s158
      %s160 = sphi 0, %s158
      %s161 = sphi 0, %s160
      %s175 = sphi 0, %s161
      %s181 = sphi 0, %s183
      %s184 = sphi 0, %s181
      %s185 = sphi 0, %s184
      %s201 = sphi 0, %s185
    $region4: #{tpu_custom_call.1} parent=1 // loop_header_branch
      %22 = sbr.rel (%p20) target = $region8
    $region5: #{tpu_custom_call.1} parent=1 // loop_body
      %s24 = ssub.s32 %s19, 1
      %s25 = ssub.s32 %s19, 2
      %s26 = sadd.s32 %s19, 1
      %s27 = ssub.s32 %s19, %s26
      %p28 = scmp.eq.s32.totalorder %s27, 0
      %s30 = sadd.s32 %s29, 1
      %s31 = scalar_select %p28, %s29, %s30
      %p34 = pneg %p28
      %p35 = scmp.eq.s32.totalorder %s19, 1
      %p36 = por %p34, %p35
      %p37 = scmp.ne.s32.totalorder %s29, %s32
      %p38 = scmp.eq.s32.totalorder %s19, 0
      %p39 = por %p37, %p38
      %p40 = scmp.ne.s32.totalorder %s29, %s32
      %p41 = scmp.eq.s32.totalorder %s24, 1
      %p42 = por %p40, %p41
      %p43 = scmp.ne.s32.totalorder %s32, %s33
      %p44 = scmp.eq.s32.totalorder %s24, 0
      %p45 = por %p43, %p44
      %p46 = scmp.ne.s32.totalorder %s32, %s33
      %p47 = scmp.eq.s32.totalorder %s25, 1
      %p48 = por %p46, %p47
      %p50 = scmp.ne.s32.totalorder %s33, %s49
      %p51 = scmp.eq.s32.totalorder %s25, 0
      %p52 = por %p50, %p51
      %s54 = sadd.s32 %s53, 1
      %p57 = scmp.eq.s32.totalorder %s19, 1
      %p58 = scmp.ne.s32.totalorder %s53, %s55
      %p59 = scmp.eq.s32.totalorder %s19, 0
      %p60 = por %p58, %p59
      %p61 = scmp.ne.s32.totalorder %s53, %s55
      %p62 = scmp.eq.s32.totalorder %s24, 1
      %p63 = por %p61, %p62
      %p64 = scmp.ne.s32.totalorder %s55, %s56
      %p65 = scmp.eq.s32.totalorder %s24, 0
      %p66 = por %p64, %p65
      %p67 = scmp.ne.s32.totalorder %s55, %s56
      %p68 = scmp.eq.s32.totalorder %s25, 1
      %p69 = por %p67, %p68
      %p71 = scmp.ne.s32.totalorder %s56, %s70
      %p72 = scmp.eq.s32.totalorder %s25, 0
      %p73 = por %p71, %p72
      %s75 = sadd.s32 %s74, 1
      %p78 = scmp.eq.s32.totalorder %s19, 1
      %p79 = scmp.ne.s32.totalorder %s74, %s76
      %p80 = scmp.eq.s32.totalorder %s19, 0
      %p81 = por %p79, %p80
      %p82 = scmp.ne.s32.totalorder %s74, %s76
      %p83 = scmp.eq.s32.totalorder %s24, 1
      %p84 = por %p82, %p83
      %p85 = scmp.ne.s32.totalorder %s76, %s77
      %p86 = scmp.eq.s32.totalorder %s24, 0
      %p87 = por %p85, %p86
      %p88 = scmp.ne.s32.totalorder %s76, %s77
      %p89 = scmp.eq.s32.totalorder %s25, 1
      %p90 = por %p88, %p89
      %p92 = scmp.ne.s32.totalorder %s77, %s91
      %p93 = scmp.eq.s32.totalorder %s25, 0
      %p94 = por %p92, %p93
      %s96 = sadd.s32 %s95, 1
      %p99 = scmp.eq.s32.totalorder %s19, 1
      %p100 = scmp.ne.s32.totalorder %s95, %s97
      %p101 = scmp.eq.s32.totalorder %s19, 0
      %p102 = por %p100, %p101
      %p103 = scmp.ne.s32.totalorder %s95, %s97
      %p104 = scmp.eq.s32.totalorder %s24, 1
      %p105 = por %p103, %p104
      %p106 = scmp.ne.s32.totalorder %s97, %s98
      %p107 = scmp.eq.s32.totalorder %s24, 0
      %p108 = por %p106, %p107
      %p109 = scmp.ne.s32.totalorder %s97, %s98
      %p110 = scmp.eq.s32.totalorder %s25, 1
      %p111 = por %p109, %p110
      %p113 = scmp.ne.s32.totalorder %s98, %s112
      %p114 = scmp.eq.s32.totalorder %s25, 0
      %p115 = por %p113, %p114
      %s117 = sadd.s32 %s116, 1
      %p120 = scmp.eq.s32.totalorder %s19, 1
      %p121 = scmp.ne.s32.totalorder %s116, %s118
      %p122 = scmp.eq.s32.totalorder %s19, 0
      %p123 = por %p121, %p122
      %p124 = scmp.ne.s32.totalorder %s116, %s118
      %p125 = scmp.eq.s32.totalorder %s24, 1
      %p126 = por %p124, %p125
      %p127 = scmp.ne.s32.totalorder %s118, %s119
      %p128 = scmp.eq.s32.totalorder %s24, 0
      %p129 = por %p127, %p128
      %p130 = scmp.ne.s32.totalorder %s118, %s119
      %p131 = scmp.eq.s32.totalorder %s25, 1
      %p132 = por %p130, %p131
      %p134 = scmp.ne.s32.totalorder %s119, %s133
      %p135 = scmp.eq.s32.totalorder %s25, 0
      %p136 = por %p134, %p135
      %s138 = sadd.s32 %s137, 1
      %p141 = scmp.eq.s32.totalorder %s19, 1
      %p142 = scmp.ne.s32.totalorder %s137, %s139
      %p143 = scmp.eq.s32.totalorder %s19, 0
      %p144 = por %p142, %p143
      %p145 = scmp.ne.s32.totalorder %s137, %s139
      %p146 = scmp.eq.s32.totalorder %s24, 1
      %p147 = por %p145, %p146
      %p148 = scmp.ne.s32.totalorder %s139, %s140
      %p149 = scmp.eq.s32.totalorder %s24, 0
      %p150 = por %p148, %p149
      %p151 = scmp.ne.s32.totalorder %s139, %s140
      %p152 = scmp.eq.s32.totalorder %s25, 1
      %p153 = por %p151, %p152
      %p155 = scmp.ne.s32.totalorder %s140, %s154
      %p156 = scmp.eq.s32.totalorder %s25, 0
      %p157 = por %p155, %p156
      %s159 = sadd.s32 %s158, 1
      %p162 = scmp.eq.s32.totalorder %s19, 1
      %p163 = scmp.ne.s32.totalorder %s158, %s160
      %p164 = scmp.eq.s32.totalorder %s19, 0
      %p165 = por %p163, %p164
      %p166 = scmp.ne.s32.totalorder %s158, %s160
      %p167 = scmp.eq.s32.totalorder %s24, 1
      %p168 = por %p166, %p167
      %p169 = scmp.ne.s32.totalorder %s160, %s161
      %p170 = scmp.eq.s32.totalorder %s24, 0
      %p171 = por %p169, %p170
      %p172 = scmp.ne.s32.totalorder %s160, %s161
      %p173 = scmp.eq.s32.totalorder %s25, 1
      %p174 = por %p172, %p173
      %p176 = scmp.ne.s32.totalorder %s161, %s175
      %p177 = scmp.eq.s32.totalorder %s25, 0
      %p178 = por %p176, %p177
      %s179 = ssub.s32 %s19, %s26
      %p180 = scmp.eq.s32.totalorder %s179, 0
      %s182 = sadd.s32 %s181, 1
      %s183 = scalar_select %p180, %s181, %s182
      %p186 = pneg %p180
      %p187 = scmp.eq.s32.totalorder %s19, 1
      %p188 = por %p186, %p187
      %p189 = scmp.ne.s32.totalorder %s181, %s184
      %p190 = scmp.eq.s32.totalorder %s19, 0
      %p191 = por %p189, %p190
      %p192 = scmp.ne.s32.totalorder %s181, %s184
      %p193 = scmp.eq.s32.totalorder %s24, 1
      %p194 = por %p192, %p193
      %p195 = scmp.ne.s32.totalorder %s184, %s185
      %p196 = scmp.eq.s32.totalorder %s24, 0
      %p197 = por %p195, %p196
      %p198 = scmp.ne.s32.totalorder %s184, %s185
      %p199 = scmp.eq.s32.totalorder %s25, 1
      %p200 = por %p198, %p199
      %p202 = scmp.ne.s32.totalorder %s185, %s201
      %p203 = scmp.eq.s32.totalorder %s25, 0
      %p204 = por %p202, %p203
      %p205 = scmp.le.s32.totalorder 1, %s19
      %p206 = scmp.lt.s32.totalorder %s19, 3
      %p207 = pnand %p205, %p206
      %p208 = pneg %p207
      // Predicated region
      $region9: #{tpu_custom_call.1} parent=5 // pred_check
        _
      $region10: #{tpu_custom_call.1} parent=5 // pred_check_branch
        %210 = sbr.rel (%p207) target = $region12
      $region11: #{tpu_custom_call.1} parent=5 // pred_region
        %s211 = ssub.s32 %s19, 1
        // Predicated region
        $region13: #{tpu_custom_call.1} parent=11 // pred_check
          %p212 = pneg %p66
        $region14: #{tpu_custom_call.1} parent=11 // pred_check_branch
          %214 = sbr.rel (%p212) target = $region16
        $region15: #{tpu_custom_call.1} parent=11 // pred_region
          _
        $region16: #{tpu_custom_call.1} parent=11 // pred_fallthru
          _
        // Predicated region
        $region17: #{tpu_custom_call.1} parent=11 // pred_check
          %p215 = pneg %p87
        $region18: #{tpu_custom_call.1} parent=11 // pred_check_branch
          %217 = sbr.rel (%p215) target = $region20
        $region19: #{tpu_custom_call.1} parent=11 // pred_region
          _
        $region20: #{tpu_custom_call.1} parent=11 // pred_fallthru
          _
        // Predicated region
        $region21: #{tpu_custom_call.1} parent=11 // pred_check
          %p218 = pneg %p108
        $region22: #{tpu_custom_call.1} parent=11 // pred_check_branch
          %220 = sbr.rel (%p218) target = $region24
        $region23: #{tpu_custom_call.1} parent=11 // pred_region
          _
        $region24: #{tpu_custom_call.1} parent=11 // pred_fallthru
          _
        // Predicated region
        $region25: #{tpu_custom_call.1} parent=11 // pred_check
          %p221 = pneg %p129
        $region26: #{tpu_custom_call.1} parent=11 // pred_check_branch
          %223 = sbr.rel (%p221) target = $region28
        $region27: #{tpu_custom_call.1} parent=11 // pred_region
          _
        $region28: #{tpu_custom_call.1} parent=11 // pred_fallthru
          _
        // Predicated region
        $region29: #{tpu_custom_call.1} parent=11 // pred_check
          %p224 = pneg %p150
        $region30: #{tpu_custom_call.1} parent=11 // pred_check_branch
          %226 = sbr.rel (%p224) target = $region32
        $region31: #{tpu_custom_call.1} parent=11 // pred_region
          _
        $region32: #{tpu_custom_call.1} parent=11 // pred_fallthru
          _
        // Predicated region
        $region33: #{tpu_custom_call.1} parent=11 // pred_check
          %p227 = pneg %p171
        $region34: #{tpu_custom_call.1} parent=11 // pred_check_branch
          %229 = sbr.rel (%p227) target = $region36
        $region35: #{tpu_custom_call.1} parent=11 // pred_region
          _
        $region36: #{tpu_custom_call.1} parent=11 // pred_fallthru
          _
      $region12: #{tpu_custom_call.1} parent=5 // pred_fallthru
        _
      %p230 = scmp.lt.s32.totalorder %s19, 2
      // Predicated region
      $region37: #{tpu_custom_call.1} parent=5 // pred_check
        %p231 = pneg %p230
      $region38: #{tpu_custom_call.1} parent=5 // pred_check_branch
        %233 = sbr.rel (%p231) target = $region40
      $region39: #{tpu_custom_call.1} parent=5 // pred_region
        // Predicated region
        $region41: #{tpu_custom_call.1} parent=39 // pred_check
          %p234 = pneg %p39
        $region42: #{tpu_custom_call.1} parent=39 // pred_check_branch
          %236 = sbr.rel (%p234) target = $region44
        $region43: #{tpu_custom_call.1} parent=39 // pred_region
          %s237 = sand.u32 %s29, 1
          %s238 = scalar_lea.sflag [#allocation3], %s237
          %s239 = sand.u32 %s29, 1
          %s240 = smul.addr %s239, 32
          %s241 = scalar_lea.vmem [#allocation2], %s240
          %243 = vsyncadd %s238, 0
          %s244 = smul.addr %s19, 4
          %s245 = smul.addr %s244, 8
          %s246 = scalar_lea.hbm %s0, %s245
          %s247 = sshll.u32 %s246, 4
          %s248 = int_to_ptr.hbm [resolvable:$true] %s247
          %s249 = sshll.u32 %s241, 4
          %s250 = int_to_ptr.vmem [resolvable:$true] %s249
          %255 = dma.hbm_to_vmem [thread:$0]  %s248, 512, %s250, %s238, 256, 256, 16
        $region44: #{tpu_custom_call.1} parent=39 // pred_fallthru
          _
      $region40: #{tpu_custom_call.1} parent=5 // pred_fallthru
        _
      %p256 = scmp.le.s32.totalorder 1, %s19
      %p257 = scmp.lt.s32.totalorder %s19, 3
      %p258 = pnand %p256, %p257
      %p259 = pneg %p258
      // Predicated region
      $region45: #{tpu_custom_call.1} parent=5 // pred_check
        _
      $region46: #{tpu_custom_call.1} parent=5 // pred_check_branch
        %261 = sbr.rel (%p258) target = $region48
      $region47: #{tpu_custom_call.1} parent=5 // pred_region
        %s262 = ssub.s32 %s19, 1
        %s263 = sand.u32 %s32, 1
        %s264 = scalar_lea.sflag [#allocation3], %s263
        %s265 = sand.u32 %s32, 1
        %s266 = smul.addr %s265, 32
        %s267 = scalar_lea.vmem [#allocation2], %s266
        // Predicated region
        $region49: #{tpu_custom_call.1} parent=47 // pred_check
          %p268 = pneg %p45
        $region50: #{tpu_custom_call.1} parent=47 // pred_check_branch
          %270 = sbr.rel (%p268) target = $region52
        $region51: #{tpu_custom_call.1} parent=47 // pred_region
          %272 = dma.done %s264, 512
        $region52: #{tpu_custom_call.1} parent=47 // pred_fallthru
          _
        %s273 = sand.u32 %s32, 1
        %s274 = scalar_lea.sflag [#allocation3], %s273
        %s275 = sand.u32 %s32, 1
        %s276 = smul.addr %s275, 32
        %s277 = scalar_lea.vmem [#allocation2], %s276
        %p278 = pneg %p45
        %p279 = pneg %p42
        %p280 = pneg %p66
        %p281 = pneg %p63
        %p282 = pneg %p87
        %p283 = pneg %p84
        %p284 = pneg %p108
        %p285 = pneg %p105
        %p286 = pneg %p129
        %p287 = pneg %p126
        %p288 = pneg %p150
        %p289 = pneg %p147
        %p290 = pneg %p171
        %p291 = pneg %p168
        %p292 = pneg %p197
        %p293 = pneg %p194
        %s294 = sand.u32 %s184, 1
        %s295 = scalar_lea.sflag [#allocation4], %s294
        %s296 = sand.u32 %s184, 1
        %s297 = smul.addr %s296, 32
        %s298 = scalar_lea.vmem [#allocation5], %s297
        %v300 = vld [vmem:[%s267] sm:$0xff]
        %v301 = vld [vmem:[%s267 + $0x8] sm:$0xff]
        %v302 = vld [vmem:[%s267 + $0x10] sm:$0xff]
        %v303 = vld [vmem:[%s267 + $0x18] sm:$0xff]
        %306 = vrot.lane.b32.xlu0 %v300, 112
        %v307 = vpop.permute.xlu0 %306
        %308 = vrot.lane.b32.xlu0 %v302, 112
        %v309 = vpop.permute.xlu0 %308
        %312 = vrot.lane.b32.xlu0 %v300, 96
        %v313 = vpop.permute.xlu0 %312
        %314 = vrot.lane.b32.xlu0 %v302, 96
        %v315 = vpop.permute.xlu0 %314
        %318 = vrot.lane.b32.xlu0 %v300, 80
        %v319 = vpop.permute.xlu0 %318
        %320 = vrot.lane.b32.xlu0 %v302, 80
        %v321 = vpop.permute.xlu0 %320
        %324 = vrot.lane.b32.xlu0 %v300, 64
        %v325 = vpop.permute.xlu0 %324
        %326 = vrot.lane.b32.xlu0 %v302, 64
        %v327 = vpop.permute.xlu0 %326
        %330 = vrot.lane.b32.xlu0 %v300, 48
        %v331 = vpop.permute.xlu0 %330
        %332 = vrot.lane.b32.xlu0 %v302, 48
        %v333 = vpop.permute.xlu0 %332
        %336 = vrot.lane.b32.xlu0 %v300, 32
        %v337 = vpop.permute.xlu0 %336
        %338 = vrot.lane.b32.xlu0 %v302, 32
        %v339 = vpop.permute.xlu0 %338
        %342 = vrot.lane.b32.xlu0 %v300, 16
        %v343 = vpop.permute.xlu0 %342
        %344 = vrot.lane.b32.xlu0 %v302, 16
        %v345 = vpop.permute.xlu0 %344
        %350 = vrot.lane.b32.xlu0 %v301, 112
        %v351 = vpop.permute.xlu0 %350
        %352 = vrot.lane.b32.xlu0 %v303, 112
        %v353 = vpop.permute.xlu0 %352
        %356 = vrot.lane.b32.xlu0 %v301, 96
        %v357 = vpop.permute.xlu0 %356
        %358 = vrot.lane.b32.xlu0 %v303, 96
        %v359 = vpop.permute.xlu0 %358
        %362 = vrot.lane.b32.xlu0 %v301, 80
        %v363 = vpop.permute.xlu0 %362
        %364 = vrot.lane.b32.xlu0 %v303, 80
        %v365 = vpop.permute.xlu0 %364
        %368 = vrot.lane.b32.xlu0 %v301, 64
        %v369 = vpop.permute.xlu0 %368
        %370 = vrot.lane.b32.xlu0 %v303, 64
        %v371 = vpop.permute.xlu0 %370
        %374 = vrot.lane.b32.xlu0 %v301, 48
        %v375 = vpop.permute.xlu0 %374
        %376 = vrot.lane.b32.xlu0 %v303, 48
        %v377 = vpop.permute.xlu0 %376
        %380 = vrot.lane.b32.xlu0 %v301, 32
        %v381 = vpop.permute.xlu0 %380
        %382 = vrot.lane.b32.xlu0 %v303, 32
        %v383 = vpop.permute.xlu0 %382
        %386 = vrot.lane.b32.xlu0 %v301, 16
        %v387 = vpop.permute.xlu0 %386
        %388 = vrot.lane.b32.xlu0 %v303, 16
        %v389 = vpop.permute.xlu0 %388
        %v392 = vpack.c.bf16 %v302, %v300
        %v393 = vpack.c.bf16 %v309, %v307
        %v394 = vpack.c.bf16 %v315, %v313
        %v395 = vpack.c.bf16 %v321, %v319
        %v396 = vpack.c.bf16 %v327, %v325
        %v397 = vpack.c.bf16 %v333, %v331
        %v398 = vpack.c.bf16 %v339, %v337
        %v399 = vpack.c.bf16 %v345, %v343
        %v400 = vpack.c.bf16 %v303, %v301
        %v401 = vpack.c.bf16 %v353, %v351
        %v402 = vpack.c.bf16 %v359, %v357
        %v403 = vpack.c.bf16 %v365, %v363
        %v404 = vpack.c.bf16 %v371, %v369
        %v405 = vpack.c.bf16 %v377, %v375
        %v406 = vpack.c.bf16 %v383, %v381
        %v407 = vpack.c.bf16 %v389, %v387
        %v408 = vld [vmem:[%s1] sm:$0xf]
        %v409 = vld [vmem:[%s1 + $0x4] sm:$0xf]
        %v410 = vld [vmem:[%s4] sm:$0x1]
        %v412 = vperm.slane %v410, 0
        %v416 = vunpack.c.l.b16 %v408
        %v417 = vunpack.c.l.b16 %v409
        %v418 = vpack.c.b16 %v417, %v416
        %vm420 = vcmask 130048
        %v422 = vsel %vm420, %v392, 0
        %v425 = vsel %vm420, %v393, 0
        %v428 = vsel %vm420, %v394, 0
        %v431 = vsel %vm420, %v395, 0
        %v434 = vsel %vm420, %v396, 0
        %v437 = vsel %vm420, %v397, 0
        %v440 = vsel %vm420, %v398, 0
        %v443 = vsel %vm420, %v399, 0
        %v446 = vsel %vm420, %v400, 0
        %v449 = vsel %vm420, %v401, 0
        %v452 = vsel %vm420, %v402, 0
        %v455 = vsel %vm420, %v403, 0
        %v458 = vsel %vm420, %v404, 0
        %v461 = vsel %vm420, %v405, 0
        %v464 = vsel %vm420, %v406, 0
        %v467 = vsel %vm420, %v407, 0
        %469 = vmatpush.bf16.msra.mxu0 0
        %470 = vmatpush.bf16.msra.mxu0 0
        %471 = vmatpush.bf16.msra.mxu0 0
        %472 = vmatpush.bf16.msra.mxu0 0
        %473 = vmatpush.bf16.msra.mxu0 0
        %474 = vmatpush.bf16.msra.mxu0 0
        %475 = vmatpush.bf16.msra.mxu0 0
        %476 = vmatpush.bf16.msra.mxu0 %v418
        %477 = vmatmul.bf16.gmra.mxu0 %v422
        %v478 = vpop.f32.mrf.mxu0
        %v479 = vadd.f32 %v412, %v478
        %v480 = vpop.f32.mrf.mxu0
        %v481 = vadd.f32 %v412, %v480
        %482 = vmatmul.bf16.gmra.mxu0 %v425
        %v483 = vpop.f32.mrf.mxu0
        %v484 = vadd.f32 %v412, %v483
        %v485 = vpop.f32.mrf.mxu0
        %v486 = vadd.f32 %v412, %v485
        %487 = vmatmul.bf16.gmra.mxu0 %v428
        %v488 = vpop.f32.mrf.mxu0
        %v489 = vadd.f32 %v412, %v488
        %v490 = vpop.f32.mrf.mxu0
        %v491 = vadd.f32 %v412, %v490
        %492 = vmatmul.bf16.gmra.mxu0 %v431
        %v493 = vpop.f32.mrf.mxu0
        %v494 = vadd.f32 %v412, %v493
        %v495 = vpop.f32.mrf.mxu0
        %v496 = vadd.f32 %v412, %v495
        %497 = vmatmul.bf16.gmra.mxu0 %v434
        %v498 = vpop.f32.mrf.mxu0
        %v499 = vadd.f32 %v412, %v498
        %v500 = vpop.f32.mrf.mxu0
        %v501 = vadd.f32 %v412, %v500
        %502 = vmatmul.bf16.gmra.mxu0 %v437
        %v503 = vpop.f32.mrf.mxu0
        %v504 = vadd.f32 %v412, %v503
        %v505 = vpop.f32.mrf.mxu0
        %v506 = vadd.f32 %v412, %v505
        %507 = vmatmul.bf16.gmra.mxu0 %v440
        %v508 = vpop.f32.mrf.mxu0
        %v509 = vadd.f32 %v412, %v508
        %v510 = vpop.f32.mrf.mxu0
        %v511 = vadd.f32 %v412, %v510
        %512 = vmatmul.bf16.gmra.mxu0 %v443
        %v513 = vpop.f32.mrf.mxu0
        %v514 = vadd.f32 %v412, %v513
        %v515 = vpop.f32.mrf.mxu0
        %v516 = vadd.f32 %v412, %v515
        %517 = vmatmul.bf16.gmra.mxu0 %v446
        %v518 = vpop.f32.mrf.mxu0
        %v519 = vadd.f32 %v412, %v518
        %v520 = vpop.f32.mrf.mxu0
        %v521 = vadd.f32 %v412, %v520
        %522 = vmatmul.bf16.gmra.mxu0 %v449
        %v523 = vpop.f32.mrf.mxu0
        %v524 = vadd.f32 %v412, %v523
        %v525 = vpop.f32.mrf.mxu0
        %v526 = vadd.f32 %v412, %v525
        %527 = vmatmul.bf16.gmra.mxu0 %v452
        %v528 = vpop.f32.mrf.mxu0
        %v529 = vadd.f32 %v412, %v528
        %v530 = vpop.f32.mrf.mxu0
        %v531 = vadd.f32 %v412, %v530
        %532 = vmatmul.bf16.gmra.mxu0 %v455
        %v533 = vpop.f32.mrf.mxu0
        %v534 = vadd.f32 %v412, %v533
        %v535 = vpop.f32.mrf.mxu0
        %v536 = vadd.f32 %v412, %v535
        %537 = vmatmul.bf16.gmra.mxu0 %v458
        %v538 = vpop.f32.mrf.mxu0
        %v539 = vadd.f32 %v412, %v538
        %v540 = vpop.f32.mrf.mxu0
        %v541 = vadd.f32 %v412, %v540
        %542 = vmatmul.bf16.gmra.mxu0 %v461
        %v543 = vpop.f32.mrf.mxu0
        %v544 = vadd.f32 %v412, %v543
        %v545 = vpop.f32.mrf.mxu0
        %v546 = vadd.f32 %v412, %v545
        %547 = vmatmul.bf16.gmra.mxu0 %v464
        %v548 = vpop.f32.mrf.mxu0
        %v549 = vadd.f32 %v412, %v548
        %v550 = vpop.f32.mrf.mxu0
        %v551 = vadd.f32 %v412, %v550
        %552 = vmatmul.bf16.gmra.mxu0 %v467
        %v553 = vpop.f32.mrf.mxu0
        %v554 = vadd.f32 %v412, %v553
        %v555 = vpop.f32.mrf.mxu0
        %v556 = vadd.f32 %v412, %v555
        %557 = vdwg.mxu0
        %v558 = vmax.f32 %v479, 0.0
        %v559 = vmax.f32 %v481, 0.0
        %v560 = vmax.f32 %v484, 0.0
        %v561 = vmax.f32 %v486, 0.0
        %v562 = vmax.f32 %v489, 0.0
        %v563 = vmax.f32 %v491, 0.0
        %v564 = vmax.f32 %v494, 0.0
        %v565 = vmax.f32 %v496, 0.0
        %v566 = vmax.f32 %v499, 0.0
        %v567 = vmax.f32 %v501, 0.0
        %v568 = vmax.f32 %v504, 0.0
        %v569 = vmax.f32 %v506, 0.0
        %v570 = vmax.f32 %v509, 0.0
        %v571 = vmax.f32 %v511, 0.0
        %v572 = vmax.f32 %v514, 0.0
        %v573 = vmax.f32 %v516, 0.0
        %v574 = vmax.f32 %v519, 0.0
        %v575 = vmax.f32 %v521, 0.0
        %v576 = vmax.f32 %v524, 0.0
        %v577 = vmax.f32 %v526, 0.0
        %v578 = vmax.f32 %v529, 0.0
        %v579 = vmax.f32 %v531, 0.0
        %v580 = vmax.f32 %v534, 0.0
        %v581 = vmax.f32 %v536, 0.0
        %v582 = vmax.f32 %v539, 0.0
        %v583 = vmax.f32 %v541, 0.0
        %v584 = vmax.f32 %v544, 0.0
        %v585 = vmax.f32 %v546, 0.0
        %v586 = vmax.f32 %v549, 0.0
        %v587 = vmax.f32 %v551, 0.0
        %v588 = vmax.f32 %v554, 0.0
        %v589 = vmax.f32 %v556, 0.0
        %vm622 = vcmask 1040384
        %v623 = vrot.slane %v558, 7
        %v624 = vrot.slane %v559, 7
        %v625 = vsel %vm622, %v623, %v624
        %v626 = vrot.slane %v560, 7
        %v627 = vsel %vm622, %v624, %v626
        %v628 = vrot.slane %v561, 7
        %v629 = vsel %vm622, %v626, %v628
        %v630 = vrot.slane %v562, 7
        %v631 = vsel %vm622, %v628, %v630
        %v632 = vrot.slane %v563, 7
        %v633 = vsel %vm622, %v630, %v632
        %v634 = vrot.slane %v564, 7
        %v635 = vsel %vm622, %v632, %v634
        %v636 = vrot.slane %v565, 7
        %v637 = vsel %vm622, %v634, %v636
        %v638 = vrot.slane %v566, 7
        %v639 = vsel %vm622, %v636, %v638
        %v640 = vrot.slane %v567, 7
        %v641 = vsel %vm622, %v638, %v640
        %v642 = vrot.slane %v568, 7
        %v643 = vsel %vm622, %v640, %v642
        %v644 = vrot.slane %v569, 7
        %v645 = vsel %vm622, %v642, %v644
        %v646 = vrot.slane %v570, 7
        %v647 = vsel %vm622, %v644, %v646
        %v648 = vrot.slane %v571, 7
        %v649 = vsel %vm622, %v646, %v648
        %v650 = vrot.slane %v572, 7
        %v651 = vsel %vm622, %v648, %v650
        %v652 = vrot.slane %v573, 7
        %v653 = vsel %vm622, %v650, %v652
        %v654 = vrot.slane %v574, 7
        %v655 = vsel %vm622, %v652, %v654
        %v656 = vrot.slane %v575, 7
        %v657 = vsel %vm622, %v654, %v656
        %v658 = vrot.slane %v576, 7
        %v659 = vsel %vm622, %v656, %v658
        %v660 = vrot.slane %v577, 7
        %v661 = vsel %vm622, %v658, %v660
        %v662 = vrot.slane %v578, 7
        %v663 = vsel %vm622, %v660, %v662
        %v664 = vrot.slane %v579, 7
        %v665 = vsel %vm622, %v662, %v664
        %v666 = vrot.slane %v580, 7
        %v667 = vsel %vm622, %v664, %v666
        %v668 = vrot.slane %v581, 7
        %v669 = vsel %vm622, %v666, %v668
        %v670 = vrot.slane %v582, 7
        %v671 = vsel %vm622, %v668, %v670
        %v672 = vrot.slane %v583, 7
        %v673 = vsel %vm622, %v670, %v672
        %v674 = vrot.slane %v584, 7
        %v675 = vsel %vm622, %v672, %v674
        %v676 = vrot.slane %v585, 7
        %v677 = vsel %vm622, %v674, %v676
        %v678 = vrot.slane %v586, 7
        %v679 = vsel %vm622, %v676, %v678
        %v680 = vrot.slane %v587, 7
        %v681 = vsel %vm622, %v678, %v680
        %v682 = vrot.slane %v588, 7
        %v683 = vsel %vm622, %v680, %v682
        %v684 = vrot.slane %v589, 7
        %v685 = vsel %vm622, %v682, %v684
        %v719 = vsel %vm622, 0.0, %v623
        %v720 = vsel %vm622, %v684, 0.0
        %v721 = vlaneseq
        %v722 = vshrl.u32 %v721, 7
        %v723 = vadd.s32 %v722, 8
        %v724 = vadd.s32 %v722, 16
        %v725 = vadd.s32 %v722, 24
        %v726 = vadd.s32 %v722, 32
        %v727 = vadd.s32 %v722, 40
        %v728 = vadd.s32 %v722, 48
        %v729 = vadd.s32 %v722, 56
        %v730 = vadd.s32 %v722, 64
        %v731 = vadd.s32 %v722, 72
        %v732 = vadd.s32 %v722, 80
        %v733 = vadd.s32 %v722, 88
        %v734 = vadd.s32 %v722, 96
        %v735 = vadd.s32 %v722, 104
        %v736 = vadd.s32 %v722, 112
        %v737 = vadd.s32 %v722, 120
        %v738 = vadd.s32 %v722, 128
        %v739 = vadd.s32 %v722, 136
        %v740 = vadd.s32 %v722, 144
        %v741 = vadd.s32 %v722, 152
        %v742 = vadd.s32 %v722, 160
        %v743 = vadd.s32 %v722, 168
        %v744 = vadd.s32 %v722, 176
        %v745 = vadd.s32 %v722, 184
        %v746 = vadd.s32 %v722, 192
        %v747 = vadd.s32 %v722, 200
        %v748 = vadd.s32 %v722, 208
        %v749 = vadd.s32 %v722, 216
        %v750 = vadd.s32 %v722, 224
        %v751 = vadd.s32 %v722, 232
        %v752 = vadd.s32 %v722, 240
        %v753 = vadd.s32 %v722, 248
        %vm754 = vcmp.lt.s32.totalorder %v722, 0
        %v755 = vsub.s32 0, %v722
        %v756 = vsel %vm754, %v755, %v722
        %v757 = vshrl.u32 %v756, 4
        %v758 = vand.u32 %v756, 15
        %v759 = vsub.s32 0, %v758
        %v760 = vsel %vm754, %v759, %v758
        %vm761 = vcmp.lt.s32.totalorder %v723, 0
        %v762 = vsub.s32 0, %v723
        %v763 = vsel %vm761, %v762, %v723
        %v764 = vshrl.u32 %v763, 4
        %v765 = vand.u32 %v763, 15
        %v766 = vsub.s32 0, %v765
        %v767 = vsel %vm761, %v766, %v765
        %vm768 = vcmp.lt.s32.totalorder %v724, 0
        %v769 = vsub.s32 0, %v724
        %v770 = vsel %vm768, %v769, %v724
        %v771 = vshrl.u32 %v770, 4
        %v772 = vand.u32 %v770, 15
        %v773 = vsub.s32 0, %v772
        %v774 = vsel %vm768, %v773, %v772
        %vm775 = vcmp.lt.s32.totalorder %v725, 0
        %v776 = vsub.s32 0, %v725
        %v777 = vsel %vm775, %v776, %v725
        %v778 = vshrl.u32 %v777, 4
        %v779 = vand.u32 %v777, 15
        %v780 = vsub.s32 0, %v779
        %v781 = vsel %vm775, %v780, %v779
        %vm782 = vcmp.lt.s32.totalorder %v726, 0
        %v783 = vsub.s32 0, %v726
        %v784 = vsel %vm782, %v783, %v726
        %v785 = vshrl.u32 %v784, 4
        %v786 = vand.u32 %v784, 15
        %v787 = vsub.s32 0, %v786
        %v788 = vsel %vm782, %v787, %v786
        %vm789 = vcmp.lt.s32.totalorder %v727, 0
        %v790 = vsub.s32 0, %v727
        %v791 = vsel %vm789, %v790, %v727
        %v792 = vshrl.u32 %v791, 4
        %v793 = vand.u32 %v791, 15
        %v794 = vsub.s32 0, %v793
        %v795 = vsel %vm789, %v794, %v793
        %vm796 = vcmp.lt.s32.totalorder %v728, 0
        %v797 = vsub.s32 0, %v728
        %v798 = vsel %vm796, %v797, %v728
        %v799 = vshrl.u32 %v798, 4
        %v800 = vand.u32 %v798, 15
        %v801 = vsub.s32 0, %v800
        %v802 = vsel %vm796, %v801, %v800
        %vm803 = vcmp.lt.s32.totalorder %v729, 0
        %v804 = vsub.s32 0, %v729
        %v805 = vsel %vm803, %v804, %v729
        %v806 = vshrl.u32 %v805, 4
        %v807 = vand.u32 %v805, 15
        %v808 = vsub.s32 0, %v807
        %v809 = vsel %vm803, %v808, %v807
        %vm810 = vcmp.lt.s32.totalorder %v730, 0
        %v811 = vsub.s32 0, %v730
        %v812 = vsel %vm810, %v811, %v730
        %v813 = vshrl.u32 %v812, 4
        %v814 = vand.u32 %v812, 15
        %v815 = vsub.s32 0, %v814
        %v816 = vsel %vm810, %v815, %v814
        %vm817 = vcmp.lt.s32.totalorder %v731, 0
        %v818 = vsub.s32 0, %v731
        %v819 = vsel %vm817, %v818, %v731
        %v820 = vshrl.u32 %v819, 4
        %v821 = vand.u32 %v819, 15
        %v822 = vsub.s32 0, %v821
        %v823 = vsel %vm817, %v822, %v821
        %vm824 = vcmp.lt.s32.totalorder %v732, 0
        %v825 = vsub.s32 0, %v732
        %v826 = vsel %vm824, %v825, %v732
        %v827 = vshrl.u32 %v826, 4
        %v828 = vand.u32 %v826, 15
        %v829 = vsub.s32 0, %v828
        %v830 = vsel %vm824, %v829, %v828
        %vm831 = vcmp.lt.s32.totalorder %v733, 0
        %v832 = vsub.s32 0, %v733
        %v833 = vsel %vm831, %v832, %v733
        %v834 = vshrl.u32 %v833, 4
        %v835 = vand.u32 %v833, 15
        %v836 = vsub.s32 0, %v835
        %v837 = vsel %vm831, %v836, %v835
        %vm838 = vcmp.lt.s32.totalorder %v734, 0
        %v839 = vsub.s32 0, %v734
        %v840 = vsel %vm838, %v839, %v734
        %v841 = vshrl.u32 %v840, 4
        %v842 = vand.u32 %v840, 15
        %v843 = vsub.s32 0, %v842
        %v844 = vsel %vm838, %v843, %v842
        %vm845 = vcmp.lt.s32.totalorder %v735, 0
        %v846 = vsub.s32 0, %v735
        %v847 = vsel %vm845, %v846, %v735
        %v848 = vshrl.u32 %v847, 4
        %v849 = vand.u32 %v847, 15
        %v850 = vsub.s32 0, %v849
        %v851 = vsel %vm845, %v850, %v849
        %vm852 = vcmp.lt.s32.totalorder %v736, 0
        %v853 = vsub.s32 0, %v736
        %v854 = vsel %vm852, %v853, %v736
        %v855 = vshrl.u32 %v854, 4
        %v856 = vand.u32 %v854, 15
        %v857 = vsub.s32 0, %v856
        %v858 = vsel %vm852, %v857, %v856
        %vm859 = vcmp.lt.s32.totalorder %v737, 0
        %v860 = vsub.s32 0, %v737
        %v861 = vsel %vm859, %v860, %v737
        %v862 = vshrl.u32 %v861, 4
        %v863 = vand.u32 %v861, 15
        %v864 = vsub.s32 0, %v863
        %v865 = vsel %vm859, %v864, %v863
        %vm866 = vcmp.lt.s32.totalorder %v738, 0
        %v867 = vsub.s32 0, %v738
        %v868 = vsel %vm866, %v867, %v738
        %v869 = vshrl.u32 %v868, 4
        %v870 = vand.u32 %v868, 15
        %v871 = vsub.s32 0, %v870
        %v872 = vsel %vm866, %v871, %v870
        %vm873 = vcmp.lt.s32.totalorder %v739, 0
        %v874 = vsub.s32 0, %v739
        %v875 = vsel %vm873, %v874, %v739
        %v876 = vshrl.u32 %v875, 4
        %v877 = vand.u32 %v875, 15
        %v878 = vsub.s32 0, %v877
        %v879 = vsel %vm873, %v878, %v877
        %vm880 = vcmp.lt.s32.totalorder %v740, 0
        %v881 = vsub.s32 0, %v740
        %v882 = vsel %vm880, %v881, %v740
        %v883 = vshrl.u32 %v882, 4
        %v884 = vand.u32 %v882, 15
        %v885 = vsub.s32 0, %v884
        %v886 = vsel %vm880, %v885, %v884
        %vm887 = vcmp.lt.s32.totalorder %v741, 0
        %v888 = vsub.s32 0, %v741
        %v889 = vsel %vm887, %v888, %v741
        %v890 = vshrl.u32 %v889, 4
        %v891 = vand.u32 %v889, 15
        %v892 = vsub.s32 0, %v891
        %v893 = vsel %vm887, %v892, %v891
        %vm894 = vcmp.lt.s32.totalorder %v742, 0
        %v895 = vsub.s32 0, %v742
        %v896 = vsel %vm894, %v895, %v742
        %v897 = vshrl.u32 %v896, 4
        %v898 = vand.u32 %v896, 15
        %v899 = vsub.s32 0, %v898
        %v900 = vsel %vm894, %v899, %v898
        %vm901 = vcmp.lt.s32.totalorder %v743, 0
        %v902 = vsub.s32 0, %v743
        %v903 = vsel %vm901, %v902, %v743
        %v904 = vshrl.u32 %v903, 4
        %v905 = vand.u32 %v903, 15
        %v906 = vsub.s32 0, %v905
        %v907 = vsel %vm901, %v906, %v905
        %vm908 = vcmp.lt.s32.totalorder %v744, 0
        %v909 = vsub.s32 0, %v744
        %v910 = vsel %vm908, %v909, %v744
        %v911 = vshrl.u32 %v910, 4
        %v912 = vand.u32 %v910, 15
        %v913 = vsub.s32 0, %v912
        %v914 = vsel %vm908, %v913, %v912
        %vm915 = vcmp.lt.s32.totalorder %v745, 0
        %v916 = vsub.s32 0, %v745
        %v917 = vsel %vm915, %v916, %v745
        %v918 = vshrl.u32 %v917, 4
        %v919 = vand.u32 %v917, 15
        %v920 = vsub.s32 0, %v919
        %v921 = vsel %vm915, %v920, %v919
        %vm922 = vcmp.lt.s32.totalorder %v746, 0
        %v923 = vsub.s32 0, %v746
        %v924 = vsel %vm922, %v923, %v746
        %v925 = vshrl.u32 %v924, 4
        %v926 = vand.u32 %v924, 15
        %v927 = vsub.s32 0, %v926
        %v928 = vsel %vm922, %v927, %v926
        %vm929 = vcmp.lt.s32.totalorder %v747, 0
        %v930 = vsub.s32 0, %v747
        %v931 = vsel %vm929, %v930, %v747
        %v932 = vshrl.u32 %v931, 4
        %v933 = vand.u32 %v931, 15
        %v934 = vsub.s32 0, %v933
        %v935 = vsel %vm929, %v934, %v933
        %vm936 = vcmp.lt.s32.totalorder %v748, 0
        %v937 = vsub.s32 0, %v748
        %v938 = vsel %vm936, %v937, %v748
        %v939 = vshrl.u32 %v938, 4
        %v940 = vand.u32 %v938, 15
        %v941 = vsub.s32 0, %v940
        %v942 = vsel %vm936, %v941, %v940
        %vm943 = vcmp.lt.s32.totalorder %v749, 0
        %v944 = vsub.s32 0, %v749
        %v945 = vsel %vm943, %v944, %v749
        %v946 = vshrl.u32 %v945, 4
        %v947 = vand.u32 %v945, 15
        %v948 = vsub.s32 0, %v947
        %v949 = vsel %vm943, %v948, %v947
        %vm950 = vcmp.lt.s32.totalorder %v750, 0
        %v951 = vsub.s32 0, %v750
        %v952 = vsel %vm950, %v951, %v750
        %v953 = vshrl.u32 %v952, 4
        %v954 = vand.u32 %v952, 15
        %v955 = vsub.s32 0, %v954
        %v956 = vsel %vm950, %v955, %v954
        %vm957 = vcmp.lt.s32.totalorder %v751, 0
        %v958 = vsub.s32 0, %v751
        %v959 = vsel %vm957, %v958, %v751
        %v960 = vshrl.u32 %v959, 4
        %v961 = vand.u32 %v959, 15
        %v962 = vsub.s32 0, %v961
        %v963 = vsel %vm957, %v962, %v961
        %vm964 = vcmp.lt.s32.totalorder %v752, 0
        %v965 = vsub.s32 0, %v752
        %v966 = vsel %vm964, %v965, %v752
        %v967 = vshrl.u32 %v966, 4
        %v968 = vand.u32 %v966, 15
        %v969 = vsub.s32 0, %v968
        %v970 = vsel %vm964, %v969, %v968
        %vm971 = vcmp.lt.s32.totalorder %v753, 0
        %v972 = vsub.s32 0, %v753
        %v973 = vsel %vm971, %v972, %v753
        %v974 = vshrl.u32 %v973, 4
        %v975 = vand.u32 %v973, 15
        %v976 = vsub.s32 0, %v975
        %v977 = vsel %vm971, %v976, %v975
        %vm978 = vcmp.ne.s32.totalorder %v760, 0
        %vm979 = vcmp.ne.s32.totalorder %v767, 0
        %vm980 = vcmp.ne.s32.totalorder %v774, 0
        %vm981 = vcmp.ne.s32.totalorder %v781, 0
        %vm982 = vcmp.ne.s32.totalorder %v788, 0
        %vm983 = vcmp.ne.s32.totalorder %v795, 0
        %vm984 = vcmp.ne.s32.totalorder %v802, 0
        %vm985 = vcmp.ne.s32.totalorder %v809, 0
        %vm986 = vcmp.ne.s32.totalorder %v816, 0
        %vm987 = vcmp.ne.s32.totalorder %v823, 0
        %vm988 = vcmp.ne.s32.totalorder %v830, 0
        %vm989 = vcmp.ne.s32.totalorder %v837, 0
        %vm990 = vcmp.ne.s32.totalorder %v844, 0
        %vm991 = vcmp.ne.s32.totalorder %v851, 0
        %vm992 = vcmp.ne.s32.totalorder %v858, 0
        %vm993 = vcmp.ne.s32.totalorder %v865, 0
        %vm994 = vcmp.ne.s32.totalorder %v872, 0
        %vm995 = vcmp.ne.s32.totalorder %v879, 0
        %vm996 = vcmp.ne.s32.totalorder %v886, 0
        %vm997 = vcmp.ne.s32.totalorder %v893, 0
        %vm998 = vcmp.ne.s32.totalorder %v900, 0
        %vm999 = vcmp.ne.s32.totalorder %v907, 0
        %vm1000 = vcmp.ne.s32.totalorder %v914, 0
        %vm1001 = vcmp.ne.s32.totalorder %v921, 0
        %vm1002 = vcmp.ne.s32.totalorder %v928, 0
        %vm1003 = vcmp.ne.s32.totalorder %v935, 0
        %vm1004 = vcmp.ne.s32.totalorder %v942, 0
        %vm1005 = vcmp.ne.s32.totalorder %v949, 0
        %vm1006 = vcmp.ne.s32.totalorder %v956, 0
        %vm1007 = vcmp.ne.s32.totalorder %v963, 0
        %vm1008 = vcmp.ne.s32.totalorder %v970, 0
        %vm1009 = vcmp.ne.s32.totalorder %v977, 0
        %vm1010 = vcmp.lt.s32.totalorder %v760, 0
        %vm1011 = vcmp.lt.s32.totalorder %v767, 0
        %vm1012 = vcmp.lt.s32.totalorder %v774, 0
        %vm1013 = vcmp.lt.s32.totalorder %v781, 0
        %vm1014 = vcmp.lt.s32.totalorder %v788, 0
        %vm1015 = vcmp.lt.s32.totalorder %v795, 0
        %vm1016 = vcmp.lt.s32.totalorder %v802, 0
        %vm1017 = vcmp.lt.s32.totalorder %v809, 0
        %vm1018 = vcmp.lt.s32.totalorder %v816, 0
        %vm1019 = vcmp.lt.s32.totalorder %v823, 0
        %vm1020 = vcmp.lt.s32.totalorder %v830, 0
        %vm1021 = vcmp.lt.s32.totalorder %v837, 0
        %vm1022 = vcmp.lt.s32.totalorder %v844, 0
        %vm1023 = vcmp.lt.s32.totalorder %v851, 0
        %vm1024 = vcmp.lt.s32.totalorder %v858, 0
        %vm1025 = vcmp.lt.s32.totalorder %v865, 0
        %vm1026 = vcmp.lt.s32.totalorder %v872, 0
        %vm1027 = vcmp.lt.s32.totalorder %v879, 0
        %vm1028 = vcmp.lt.s32.totalorder %v886, 0
        %vm1029 = vcmp.lt.s32.totalorder %v893, 0
        %vm1030 = vcmp.lt.s32.totalorder %v900, 0
        %vm1031 = vcmp.lt.s32.totalorder %v907, 0
        %vm1032 = vcmp.lt.s32.totalorder %v914, 0
        %vm1033 = vcmp.lt.s32.totalorder %v921, 0
        %vm1034 = vcmp.lt.s32.totalorder %v928, 0
        %vm1035 = vcmp.lt.s32.totalorder %v935, 0
        %vm1036 = vcmp.lt.s32.totalorder %v942, 0
        %vm1037 = vcmp.lt.s32.totalorder %v949, 0
        %vm1038 = vcmp.lt.s32.totalorder %v956, 0
        %vm1039 = vcmp.lt.s32.totalorder %v963, 0
        %vm1040 = vcmp.lt.s32.totalorder %v970, 0
        %vm1041 = vcmp.lt.s32.totalorder %v977, 0
        %vm1042 = vmand %vm1010, %vm978
        %vm1043 = vmand %vm1011, %vm979
        %vm1044 = vmand %vm1012, %vm980
        %vm1045 = vmand %vm1013, %vm981
        %vm1046 = vmand %vm1014, %vm982
        %vm1047 = vmand %vm1015, %vm983
        %vm1048 = vmand %vm1016, %vm984
        %vm1049 = vmand %vm1017, %vm985
        %vm1050 = vmand %vm1018, %vm986
        %vm1051 = vmand %vm1019, %vm987
        %vm1052 = vmand %vm1020, %vm988
        %vm1053 = vmand %vm1021, %vm989
        %vm1054 = vmand %vm1022, %vm990
        %vm1055 = vmand %vm1023, %vm991
        %vm1056 = vmand %vm1024, %vm992
        %vm1057 = vmand %vm1025, %vm993
        %vm1058 = vmand %vm1026, %vm994
        %vm1059 = vmand %vm1027, %vm995
        %vm1060 = vmand %vm1028, %vm996
        %vm1061 = vmand %vm1029, %vm997
        %vm1062 = vmand %vm1030, %vm998
        %vm1063 = vmand %vm1031, %vm999
        %vm1064 = vmand %vm1032, %vm1000
        %vm1065 = vmand %vm1033, %vm1001
        %vm1066 = vmand %vm1034, %vm1002
        %vm1067 = vmand %vm1035, %vm1003
        %vm1068 = vmand %vm1036, %vm1004
        %vm1069 = vmand %vm1037, %vm1005
        %vm1070 = vmand %vm1038, %vm1006
        %vm1071 = vmand %vm1039, %vm1007
        %vm1072 = vmand %vm1040, %vm1008
        %vm1073 = vmand %vm1041, %vm1009
        %v1074 = vadd.s32 %v760, 16
        %v1075 = vadd.s32 %v767, 16
        %v1076 = vadd.s32 %v774, 16
        %v1077 = vadd.s32 %v781, 16
        %v1078 = vadd.s32 %v788, 16
        %v1079 = vadd.s32 %v795, 16
        %v1080 = vadd.s32 %v802, 16
        %v1081 = vadd.s32 %v809, 16
        %v1082 = vadd.s32 %v816, 16
        %v1083 = vadd.s32 %v823, 16
        %v1084 = vadd.s32 %v830, 16
        %v1085 = vadd.s32 %v837, 16
        %v1086 = vadd.s32 %v844, 16
        %v1087 = vadd.s32 %v851, 16
        %v1088 = vadd.s32 %v858, 16
        %v1089 = vadd.s32 %v865, 16
        %v1090 = vadd.s32 %v872, 16
        %v1091 = vadd.s32 %v879, 16
        %v1092 = vadd.s32 %v886, 16
        %v1093 = vadd.s32 %v893, 16
        %v1094 = vadd.s32 %v900, 16
        %v1095 = vadd.s32 %v907, 16
        %v1096 = vadd.s32 %v914, 16
        %v1097 = vadd.s32 %v921, 16
        %v1098 = vadd.s32 %v928, 16
        %v1099 = vadd.s32 %v935, 16
        %v1100 = vadd.s32 %v942, 16
        %v1101 = vadd.s32 %v949, 16
        %v1102 = vadd.s32 %v956, 16
        %v1103 = vadd.s32 %v963, 16
        %v1104 = vadd.s32 %v970, 16
        %v1105 = vadd.s32 %v977, 16
        %v1106 = vsel %vm1042, %v1074, %v760
        %v1107 = vsel %vm1043, %v1075, %v767
        %v1108 = vsel %vm1044, %v1076, %v774
        %v1109 = vsel %vm1045, %v1077, %v781
        %v1110 = vsel %vm1046, %v1078, %v788
        %v1111 = vsel %vm1047, %v1079, %v795
        %v1112 = vsel %vm1048, %v1080, %v802
        %v1113 = vsel %vm1049, %v1081, %v809
        %v1114 = vsel %vm1050, %v1082, %v816
        %v1115 = vsel %vm1051, %v1083, %v823
        %v1116 = vsel %vm1052, %v1084, %v830
        %v1117 = vsel %vm1053, %v1085, %v837
        %v1118 = vsel %vm1054, %v1086, %v844
        %v1119 = vsel %vm1055, %v1087, %v851
        %v1120 = vsel %vm1056, %v1088, %v858
        %v1121 = vsel %vm1057, %v1089, %v865
        %v1122 = vsel %vm1058, %v1090, %v872
        %v1123 = vsel %vm1059, %v1091, %v879
        %v1124 = vsel %vm1060, %v1092, %v886
        %v1125 = vsel %vm1061, %v1093, %v893
        %v1126 = vsel %vm1062, %v1094, %v900
        %v1127 = vsel %vm1063, %v1095, %v907
        %v1128 = vsel %vm1064, %v1096, %v914
        %v1129 = vsel %vm1065, %v1097, %v921
        %v1130 = vsel %vm1066, %v1098, %v928
        %v1131 = vsel %vm1067, %v1099, %v935
        %v1132 = vsel %vm1068, %v1100, %v942
        %v1133 = vsel %vm1069, %v1101, %v949
        %v1134 = vsel %vm1070, %v1102, %v956
        %v1135 = vsel %vm1071, %v1103, %v963
        %v1136 = vsel %vm1072, %v1104, %v970
        %v1137 = vsel %vm1073, %v1105, %v977
        %vm1138 = vcmp.ge.s32.totalorder %v1106, 1
        %vm1139 = vcmp.ge.s32.totalorder %v1107, 1
        %vm1140 = vcmp.ge.s32.totalorder %v1108, 1
        %vm1141 = vcmp.ge.s32.totalorder %v1109, 1
        %vm1142 = vcmp.ge.s32.totalorder %v1110, 1
        %vm1143 = vcmp.ge.s32.totalorder %v1111, 1
        %vm1144 = vcmp.ge.s32.totalorder %v1112, 1
        %vm1145 = vcmp.ge.s32.totalorder %v1113, 1
        %vm1146 = vcmp.ge.s32.totalorder %v1114, 1
        %vm1147 = vcmp.ge.s32.totalorder %v1115, 1
        %vm1148 = vcmp.ge.s32.totalorder %v1116, 1
        %vm1149 = vcmp.ge.s32.totalorder %v1117, 1
        %vm1150 = vcmp.ge.s32.totalorder %v1118, 1
        %vm1151 = vcmp.ge.s32.totalorder %v1119, 1
        %vm1152 = vcmp.ge.s32.totalorder %v1120, 1
        %vm1153 = vcmp.ge.s32.totalorder %v1121, 1
        %vm1154 = vcmp.ge.s32.totalorder %v1122, 1
        %vm1155 = vcmp.ge.s32.totalorder %v1123, 1
        %vm1156 = vcmp.ge.s32.totalorder %v1124, 1
        %vm1157 = vcmp.ge.s32.totalorder %v1125, 1
        %vm1158 = vcmp.ge.s32.totalorder %v1126, 1
        %vm1159 = vcmp.ge.s32.totalorder %v1127, 1
        %vm1160 = vcmp.ge.s32.totalorder %v1128, 1
        %vm1161 = vcmp.ge.s32.totalorder %v1129, 1
        %vm1162 = vcmp.ge.s32.totalorder %v1130, 1
        %vm1163 = vcmp.ge.s32.totalorder %v1131, 1
        %vm1164 = vcmp.ge.s32.totalorder %v1132, 1
        %vm1165 = vcmp.ge.s32.totalorder %v1133, 1
        %vm1166 = vcmp.ge.s32.totalorder %v1134, 1
        %vm1167 = vcmp.ge.s32.totalorder %v1135, 1
        %vm1168 = vcmp.ge.s32.totalorder %v1136, 1
        %vm1169 = vcmp.ge.s32.totalorder %v1137, 1
        %vm1170 = vcmp.le.s32.totalorder %v1106, 14
        %vm1171 = vcmp.le.s32.totalorder %v1107, 14
        %vm1172 = vcmp.le.s32.totalorder %v1108, 14
        %vm1173 = vcmp.le.s32.totalorder %v1109, 14
        %vm1174 = vcmp.le.s32.totalorder %v1110, 14
        %vm1175 = vcmp.le.s32.totalorder %v1111, 14
        %vm1176 = vcmp.le.s32.totalorder %v1112, 14
        %vm1177 = vcmp.le.s32.totalorder %v1113, 14
        %vm1178 = vcmp.le.s32.totalorder %v1114, 14
        %vm1179 = vcmp.le.s32.totalorder %v1115, 14
        %vm1180 = vcmp.le.s32.totalorder %v1116, 14
        %vm1181 = vcmp.le.s32.totalorder %v1117, 14
        %vm1182 = vcmp.le.s32.totalorder %v1118, 14
        %vm1183 = vcmp.le.s32.totalorder %v1119, 14
        %vm1184 = vcmp.le.s32.totalorder %v1120, 14
        %vm1185 = vcmp.le.s32.totalorder %v1121, 14
        %vm1186 = vcmp.le.s32.totalorder %v1122, 14
        %vm1187 = vcmp.le.s32.totalorder %v1123, 14
        %vm1188 = vcmp.le.s32.totalorder %v1124, 14
        %vm1189 = vcmp.le.s32.totalorder %v1125, 14
        %vm1190 = vcmp.le.s32.totalorder %v1126, 14
        %vm1191 = vcmp.le.s32.totalorder %v1127, 14
        %vm1192 = vcmp.le.s32.totalorder %v1128, 14
        %vm1193 = vcmp.le.s32.totalorder %v1129, 14
        %vm1194 = vcmp.le.s32.totalorder %v1130, 14
        %vm1195 = vcmp.le.s32.totalorder %v1131, 14
        %vm1196 = vcmp.le.s32.totalorder %v1132, 14
        %vm1197 = vcmp.le.s32.totalorder %v1133, 14
        %vm1198 = vcmp.le.s32.totalorder %v1134, 14
        %vm1199 = vcmp.le.s32.totalorder %v1135, 14
        %vm1200 = vcmp.le.s32.totalorder %v1136, 14
        %vm1201 = vcmp.le.s32.totalorder %v1137, 14
        %v1202 = vsel %vm1140, %v719, 0.0
        %v1203 = vsel %vm1141, %v625, 0.0
        %v1204 = vsel %vm1142, %v627, 0.0
        %v1205 = vsel %vm1143, %v629, 0.0
        %v1206 = vsel %vm1144, %v631, 0.0
        %v1207 = vsel %vm1145, %v633, 0.0
        %v1208 = vsel %vm1146, %v635, 0.0
        %v1209 = vsel %vm1147, %v637, 0.0
        %v1210 = vsel %vm1148, %v639, 0.0
        %v1211 = vsel %vm1149, %v641, 0.0
        %v1212 = vsel %vm1150, %v643, 0.0
        %v1213 = vsel %vm1151, %v645, 0.0
        %v1214 = vsel %vm1152, %v647, 0.0
        %v1215 = vsel %vm1153, %v649, 0.0
        %v1216 = vsel %vm1154, %v651, 0.0
        %v1217 = vsel %vm1155, %v653, 0.0
        %v1218 = vsel %vm1156, %v655, 0.0
        %v1219 = vsel %vm1157, %v657, 0.0
        %v1220 = vsel %vm1158, %v659, 0.0
        %v1221 = vsel %vm1159, %v661, 0.0
        %v1222 = vsel %vm1160, %v663, 0.0
        %v1223 = vsel %vm1161, %v665, 0.0
        %v1224 = vsel %vm1162, %v667, 0.0
        %v1225 = vsel %vm1163, %v669, 0.0
        %v1226 = vsel %vm1164, %v671, 0.0
        %v1227 = vsel %vm1165, %v673, 0.0
        %v1228 = vsel %vm1166, %v675, 0.0
        %v1229 = vsel %vm1167, %v677, 0.0
        %v1230 = vsel %vm1168, %v679, 0.0
        %v1231 = vsel %vm1169, %v681, 0.0
        %v1232 = vsel %vm1138, %v719, 0.0
        %v1233 = vsel %vm1139, %v625, 0.0
        %v1234 = vsel %vm1140, %v627, 0.0
        %v1235 = vsel %vm1141, %v629, 0.0
        %v1236 = vsel %vm1142, %v631, 0.0
        %v1237 = vsel %vm1143, %v633, 0.0
        %v1238 = vsel %vm1144, %v635, 0.0
        %v1239 = vsel %vm1145, %v637, 0.0
        %v1240 = vsel %vm1146, %v639, 0.0
        %v1241 = vsel %vm1147, %v641, 0.0
        %v1242 = vsel %vm1148, %v643, 0.0
        %v1243 = vsel %vm1149, %v645, 0.0
        %v1244 = vsel %vm1150, %v647, 0.0
        %v1245 = vsel %vm1151, %v649, 0.0
        %v1246 = vsel %vm1152, %v651, 0.0
        %v1247 = vsel %vm1153, %v653, 0.0
        %v1248 = vsel %vm1154, %v655, 0.0
        %v1249 = vsel %vm1155, %v657, 0.0
        %v1250 = vsel %vm1156, %v659, 0.0
        %v1251 = vsel %vm1157, %v661, 0.0
        %v1252 = vsel %vm1158, %v663, 0.0
        %v1253 = vsel %vm1159, %v665, 0.0
        %v1254 = vsel %vm1160, %v667, 0.0
        %v1255 = vsel %vm1161, %v669, 0.0
        %v1256 = vsel %vm1162, %v671, 0.0
        %v1257 = vsel %vm1163, %v673, 0.0
        %v1258 = vsel %vm1164, %v675, 0.0
        %v1259 = vsel %vm1165, %v677, 0.0
        %v1260 = vsel %vm1166, %v679, 0.0
        %v1261 = vsel %vm1167, %v681, 0.0
        %v1262 = vsel %vm1168, %v683, 0.0
        %v1263 = vsel %vm1169, %v685, 0.0
        %v1264 = vsel %vm1138, %v627, 0.0
        %v1265 = vsel %vm1139, %v629, 0.0
        %v1266 = vsel %vm1140, %v631, 0.0
        %v1267 = vsel %vm1141, %v633, 0.0
        %v1268 = vsel %vm1142, %v635, 0.0
        %v1269 = vsel %vm1143, %v637, 0.0
        %v1270 = vsel %vm1144, %v639, 0.0
        %v1271 = vsel %vm1145, %v641, 0.0
        %v1272 = vsel %vm1146, %v643, 0.0
        %v1273 = vsel %vm1147, %v645, 0.0
        %v1274 = vsel %vm1148, %v647, 0.0
        %v1275 = vsel %vm1149, %v649, 0.0
        %v1276 = vsel %vm1150, %v651, 0.0
        %v1277 = vsel %vm1151, %v653, 0.0
        %v1278 = vsel %vm1152, %v655, 0.0
        %v1279 = vsel %vm1153, %v657, 0.0
        %v1280 = vsel %vm1154, %v659, 0.0
        %v1281 = vsel %vm1155, %v661, 0.0
        %v1282 = vsel %vm1156, %v663, 0.0
        %v1283 = vsel %vm1157, %v665, 0.0
        %v1284 = vsel %vm1158, %v667, 0.0
        %v1285 = vsel %vm1159, %v669, 0.0
        %v1286 = vsel %vm1160, %v671, 0.0
        %v1287 = vsel %vm1161, %v673, 0.0
        %v1288 = vsel %vm1162, %v675, 0.0
        %v1289 = vsel %vm1163, %v677, 0.0
        %v1290 = vsel %vm1164, %v679, 0.0
        %v1291 = vsel %vm1165, %v681, 0.0
        %v1292 = vsel %vm1166, %v683, 0.0
        %v1293 = vsel %vm1167, %v685, 0.0
        %v1294 = vsel %vm1168, %v720, 0.0
        %vm1297 = vcmask 1045504
        %v1298 = vrot.slane 0.0, 2
        %v1299 = vsel %vm1297, %v1298, %v1298
        %v1300 = vrot.slane %v719, 2
        %v1301 = vsel %vm1297, %v1298, %v1300
        %v1302 = vrot.slane %v625, 2
        %v1303 = vsel %vm1297, %v1300, %v1302
        %v1304 = vrot.slane %v627, 2
        %v1305 = vsel %vm1297, %v1302, %v1304
        %v1306 = vrot.slane %v629, 2
        %v1307 = vsel %vm1297, %v1304, %v1306
        %v1308 = vrot.slane %v631, 2
        %v1309 = vsel %vm1297, %v1306, %v1308
        %v1310 = vrot.slane %v633, 2
        %v1311 = vsel %vm1297, %v1308, %v1310
        %v1312 = vrot.slane %v635, 2
        %v1313 = vsel %vm1297, %v1310, %v1312
        %v1314 = vrot.slane %v637, 2
        %v1315 = vsel %vm1297, %v1312, %v1314
        %v1316 = vrot.slane %v639, 2
        %v1317 = vsel %vm1297, %v1314, %v1316
        %v1318 = vrot.slane %v641, 2
        %v1319 = vsel %vm1297, %v1316, %v1318
        %v1320 = vrot.slane %v643, 2
        %v1321 = vsel %vm1297, %v1318, %v1320
        %v1322 = vrot.slane %v645, 2
        %v1323 = vsel %vm1297, %v1320, %v1322
        %v1324 = vrot.slane %v647, 2
        %v1325 = vsel %vm1297, %v1322, %v1324
        %v1326 = vrot.slane %v649, 2
        %v1327 = vsel %vm1297, %v1324, %v1326
        %v1328 = vrot.slane %v651, 2
        %v1329 = vsel %vm1297, %v1326, %v1328
        %v1330 = vrot.slane %v653, 2
        %v1331 = vsel %vm1297, %v1328, %v1330
        %v1332 = vrot.slane %v655, 2
        %v1333 = vsel %vm1297, %v1330, %v1332
        %v1334 = vrot.slane %v657, 2
        %v1335 = vsel %vm1297, %v1332, %v1334
        %v1336 = vrot.slane %v659, 2
        %v1337 = vsel %vm1297, %v1334, %v1336
        %v1338 = vrot.slane %v661, 2
        %v1339 = vsel %vm1297, %v1336, %v1338
        %v1340 = vrot.slane %v663, 2
        %v1341 = vsel %vm1297, %v1338, %v1340
        %v1342 = vrot.slane %v665, 2
        %v1343 = vsel %vm1297, %v1340, %v1342
        %v1344 = vrot.slane %v667, 2
        %v1345 = vsel %vm1297, %v1342, %v1344
        %v1346 = vrot.slane %v669, 2
        %v1347 = vsel %vm1297, %v1344, %v1346
        %v1348 = vrot.slane %v671, 2
        %v1349 = vsel %vm1297, %v1346, %v1348
        %v1350 = vrot.slane %v673, 2
        %v1351 = vsel %vm1297, %v1348, %v1350
        %v1352 = vrot.slane %v675, 2
        %v1353 = vsel %vm1297, %v1350, %v1352
        %v1354 = vrot.slane %v677, 2
        %v1355 = vsel %vm1297, %v1352, %v1354
        %v1356 = vrot.slane %v679, 2
        %v1357 = vsel %vm1297, %v1354, %v1356
        %v1358 = vrot.slane %v681, 2
        %v1359 = vsel %vm1297, %v1356, %v1358
        %v1360 = vrot.slane %v683, 2
        %v1361 = vsel %vm1297, %v1358, %v1360
        %v1394 = vsel %vm1170, %v1299, 0.0
        %v1395 = vsel %vm1171, %v1301, 0.0
        %v1396 = vsel %vm1172, %v1303, 0.0
        %v1397 = vsel %vm1173, %v1305, 0.0
        %v1398 = vsel %vm1174, %v1307, 0.0
        %v1399 = vsel %vm1175, %v1309, 0.0
        %v1400 = vsel %vm1176, %v1311, 0.0
        %v1401 = vsel %vm1177, %v1313, 0.0
        %v1402 = vsel %vm1178, %v1315, 0.0
        %v1403 = vsel %vm1179, %v1317, 0.0
        %v1404 = vsel %vm1180, %v1319, 0.0
        %v1405 = vsel %vm1181, %v1321, 0.0
        %v1406 = vsel %vm1182, %v1323, 0.0
        %v1407 = vsel %vm1183, %v1325, 0.0
        %v1408 = vsel %vm1184, %v1327, 0.0
        %v1409 = vsel %vm1185, %v1329, 0.0
        %v1410 = vsel %vm1186, %v1331, 0.0
        %v1411 = vsel %vm1187, %v1333, 0.0
        %v1412 = vsel %vm1188, %v1335, 0.0
        %v1413 = vsel %vm1189, %v1337, 0.0
        %v1414 = vsel %vm1190, %v1339, 0.0
        %v1415 = vsel %vm1191, %v1341, 0.0
        %v1416 = vsel %vm1192, %v1343, 0.0
        %v1417 = vsel %vm1193, %v1345, 0.0
        %v1418 = vsel %vm1194, %v1347, 0.0
        %v1419 = vsel %vm1195, %v1349, 0.0
        %v1420 = vsel %vm1196, %v1351, 0.0
        %v1421 = vsel %vm1197, %v1353, 0.0
        %v1422 = vsel %vm1198, %v1355, 0.0
        %v1423 = vsel %vm1199, %v1357, 0.0
        %v1424 = vsel %vm1200, %v1359, 0.0
        %v1425 = vsel %vm1201, %v1361, 0.0
        %v1427 = vrot.slane %v685, 2
        %v1428 = vsel %vm1297, %v1360, %v1427
        %v1429 = vrot.slane %v720, 2
        %v1430 = vsel %vm1297, %v1427, %v1429
        %v1433 = vsel %vm1170, %v1303, 0.0
        %v1434 = vsel %vm1171, %v1305, 0.0
        %v1435 = vsel %vm1172, %v1307, 0.0
        %v1436 = vsel %vm1173, %v1309, 0.0
        %v1437 = vsel %vm1174, %v1311, 0.0
        %v1438 = vsel %vm1175, %v1313, 0.0
        %v1439 = vsel %vm1176, %v1315, 0.0
        %v1440 = vsel %vm1177, %v1317, 0.0
        %v1441 = vsel %vm1178, %v1319, 0.0
        %v1442 = vsel %vm1179, %v1321, 0.0
        %v1443 = vsel %vm1180, %v1323, 0.0
        %v1444 = vsel %vm1181, %v1325, 0.0
        %v1445 = vsel %vm1182, %v1327, 0.0
        %v1446 = vsel %vm1183, %v1329, 0.0
        %v1447 = vsel %vm1184, %v1331, 0.0
        %v1448 = vsel %vm1185, %v1333, 0.0
        %v1449 = vsel %vm1186, %v1335, 0.0
        %v1450 = vsel %vm1187, %v1337, 0.0
        %v1451 = vsel %vm1188, %v1339, 0.0
        %v1452 = vsel %vm1189, %v1341, 0.0
        %v1453 = vsel %vm1190, %v1343, 0.0
        %v1454 = vsel %vm1191, %v1345, 0.0
        %v1455 = vsel %vm1192, %v1347, 0.0
        %v1456 = vsel %vm1193, %v1349, 0.0
        %v1457 = vsel %vm1194, %v1351, 0.0
        %v1458 = vsel %vm1195, %v1353, 0.0
        %v1459 = vsel %vm1196, %v1355, 0.0
        %v1460 = vsel %vm1197, %v1357, 0.0
        %v1461 = vsel %vm1198, %v1359, 0.0
        %v1462 = vsel %vm1199, %v1361, 0.0
        %v1463 = vsel %vm1200, %v1428, 0.0
        %v1464 = vsel %vm1201, %v1430, 0.0
        %v1465 = vsel %vm1297, %v1429, %v1298
        %v1467 = vsel %vm1170, %v1307, 0.0
        %v1468 = vsel %vm1171, %v1309, 0.0
        %v1469 = vsel %vm1172, %v1311, 0.0
        %v1470 = vsel %vm1173, %v1313, 0.0
        %v1471 = vsel %vm1174, %v1315, 0.0
        %v1472 = vsel %vm1175, %v1317, 0.0
        %v1473 = vsel %vm1176, %v1319, 0.0
        %v1474 = vsel %vm1177, %v1321, 0.0
        %v1475 = vsel %vm1178, %v1323, 0.0
        %v1476 = vsel %vm1179, %v1325, 0.0
        %v1477 = vsel %vm1180, %v1327, 0.0
        %v1478 = vsel %vm1181, %v1329, 0.0
        %v1479 = vsel %vm1182, %v1331, 0.0
        %v1480 = vsel %vm1183, %v1333, 0.0
        %v1481 = vsel %vm1184, %v1335, 0.0
        %v1482 = vsel %vm1185, %v1337, 0.0
        %v1483 = vsel %vm1186, %v1339, 0.0
        %v1484 = vsel %vm1187, %v1341, 0.0
        %v1485 = vsel %vm1188, %v1343, 0.0
        %v1486 = vsel %vm1189, %v1345, 0.0
        %v1487 = vsel %vm1190, %v1347, 0.0
        %v1488 = vsel %vm1191, %v1349, 0.0
        %v1489 = vsel %vm1192, %v1351, 0.0
        %v1490 = vsel %vm1193, %v1353, 0.0
        %v1491 = vsel %vm1194, %v1355, 0.0
        %v1492 = vsel %vm1195, %v1357, 0.0
        %v1493 = vsel %vm1196, %v1359, 0.0
        %v1494 = vsel %vm1197, %v1361, 0.0
        %v1495 = vsel %vm1198, %v1428, 0.0
        %v1496 = vsel %vm1199, %v1430, 0.0
        %v1497 = vsel %vm1200, %v1465, 0.0
        %v1498 = vsel %vm1201, %v1299, 0.0
        %1531 = vrot.lane.b32.xlu0 %v1232, 4
        %v1532 = vpop.permute.xlu0 %1531
        %1533 = vrot.lane.b32.xlu0 %v1233, 4
        %v1534 = vpop.permute.xlu0 %1533
        %1535 = vrot.lane.b32.xlu0 %v1234, 4
        %v1536 = vpop.permute.xlu0 %1535
        %1537 = vrot.lane.b32.xlu0 %v1235, 4
        %v1538 = vpop.permute.xlu0 %1537
        %1539 = vrot.lane.b32.xlu0 %v1236, 4
        %v1540 = vpop.permute.xlu0 %1539
        %1541 = vrot.lane.b32.xlu0 %v1237, 4
        %v1542 = vpop.permute.xlu0 %1541
        %1543 = vrot.lane.b32.xlu0 %v1238, 4
        %v1544 = vpop.permute.xlu0 %1543
        %1545 = vrot.lane.b32.xlu0 %v1239, 4
        %v1546 = vpop.permute.xlu0 %1545
        %1547 = vrot.lane.b32.xlu0 %v1240, 4
        %v1548 = vpop.permute.xlu0 %1547
        %1549 = vrot.lane.b32.xlu0 %v1241, 4
        %v1550 = vpop.permute.xlu0 %1549
        %1551 = vrot.lane.b32.xlu0 %v1242, 4
        %v1552 = vpop.permute.xlu0 %1551
        %1553 = vrot.lane.b32.xlu0 %v1243, 4
        %v1554 = vpop.permute.xlu0 %1553
        %1555 = vrot.lane.b32.xlu0 %v1244, 4
        %v1556 = vpop.permute.xlu0 %1555
        %1557 = vrot.lane.b32.xlu0 %v1245, 4
        %v1558 = vpop.permute.xlu0 %1557
        %1559 = vrot.lane.b32.xlu0 %v1246, 4
        %v1560 = vpop.permute.xlu0 %1559
        %1561 = vrot.lane.b32.xlu0 %v1247, 4
        %v1562 = vpop.permute.xlu0 %1561
        %1563 = vrot.lane.b32.xlu0 %v1248, 4
        %v1564 = vpop.permute.xlu0 %1563
        %1565 = vrot.lane.b32.xlu0 %v1249, 4
        %v1566 = vpop.permute.xlu0 %1565
        %1567 = vrot.lane.b32.xlu0 %v1250, 4
        %v1568 = vpop.permute.xlu0 %1567
        %1569 = vrot.lane.b32.xlu0 %v1251, 4
        %v1570 = vpop.permute.xlu0 %1569
        %1571 = vrot.lane.b32.xlu0 %v1252, 4
        %v1572 = vpop.permute.xlu0 %1571
        %1573 = vrot.lane.b32.xlu0 %v1253, 4
        %v1574 = vpop.permute.xlu0 %1573
        %1575 = vrot.lane.b32.xlu0 %v1254, 4
        %v1576 = vpop.permute.xlu0 %1575
        %1577 = vrot.lane.b32.xlu0 %v1255, 4
        %v1578 = vpop.permute.xlu0 %1577
        %1579 = vrot.lane.b32.xlu0 %v1256, 4
        %v1580 = vpop.permute.xlu0 %1579
        %1581 = vrot.lane.b32.xlu0 %v1257, 4
        %v1582 = vpop.permute.xlu0 %1581
        %1583 = vrot.lane.b32.xlu0 %v1258, 4
        %v1584 = vpop.permute.xlu0 %1583
        %1585 = vrot.lane.b32.xlu0 %v1259, 4
        %v1586 = vpop.permute.xlu0 %1585
        %1587 = vrot.lane.b32.xlu0 %v1260, 4
        %v1588 = vpop.permute.xlu0 %1587
        %1589 = vrot.lane.b32.xlu0 %v1261, 4
        %v1590 = vpop.permute.xlu0 %1589
        %1591 = vrot.lane.b32.xlu0 %v1262, 4
        %v1592 = vpop.permute.xlu0 %1591
        %1593 = vrot.lane.b32.xlu0 %v1263, 4
        %v1594 = vpop.permute.xlu0 %1593
        %1658 = vrot.lane.b32.xlu0 %v1264, 8
        %v1659 = vpop.permute.xlu0 %1658
        %1660 = vrot.lane.b32.xlu0 %v1265, 8
        %v1661 = vpop.permute.xlu0 %1660
        %1662 = vrot.lane.b32.xlu0 %v1266, 8
        %v1663 = vpop.permute.xlu0 %1662
        %1664 = vrot.lane.b32.xlu0 %v1267, 8
        %v1665 = vpop.permute.xlu0 %1664
        %1666 = vrot.lane.b32.xlu0 %v1268, 8
        %v1667 = vpop.permute.xlu0 %1666
        %1668 = vrot.lane.b32.xlu0 %v1269, 8
        %v1669 = vpop.permute.xlu0 %1668
        %1670 = vrot.lane.b32.xlu0 %v1270, 8
        %v1671 = vpop.permute.xlu0 %1670
        %1672 = vrot.lane.b32.xlu0 %v1271, 8
        %v1673 = vpop.permute.xlu0 %1672
        %1674 = vrot.lane.b32.xlu0 %v1272, 8
        %v1675 = vpop.permute.xlu0 %1674
        %1676 = vrot.lane.b32.xlu0 %v1273, 8
        %v1677 = vpop.permute.xlu0 %1676
        %1678 = vrot.lane.b32.xlu0 %v1274, 8
        %v1679 = vpop.permute.xlu0 %1678
        %1680 = vrot.lane.b32.xlu0 %v1275, 8
        %v1681 = vpop.permute.xlu0 %1680
        %1682 = vrot.lane.b32.xlu0 %v1276, 8
        %v1683 = vpop.permute.xlu0 %1682
        %1684 = vrot.lane.b32.xlu0 %v1277, 8
        %v1685 = vpop.permute.xlu0 %1684
        %1686 = vrot.lane.b32.xlu0 %v1278, 8
        %v1687 = vpop.permute.xlu0 %1686
        %1688 = vrot.lane.b32.xlu0 %v1279, 8
        %v1689 = vpop.permute.xlu0 %1688
        %1690 = vrot.lane.b32.xlu0 %v1280, 8
        %v1691 = vpop.permute.xlu0 %1690
        %1692 = vrot.lane.b32.xlu0 %v1281, 8
        %v1693 = vpop.permute.xlu0 %1692
        %1694 = vrot.lane.b32.xlu0 %v1282, 8
        %v1695 = vpop.permute.xlu0 %1694
        %1696 = vrot.lane.b32.xlu0 %v1283, 8
        %v1697 = vpop.permute.xlu0 %1696
        %1698 = vrot.lane.b32.xlu0 %v1284, 8
        %v1699 = vpop.permute.xlu0 %1698
        %1700 = vrot.lane.b32.xlu0 %v1285, 8
        %v1701 = vpop.permute.xlu0 %1700
        %1702 = vrot.lane.b32.xlu0 %v1286, 8
        %v1703 = vpop.permute.xlu0 %1702
        %1704 = vrot.lane.b32.xlu0 %v1287, 8
        %v1705 = vpop.permute.xlu0 %1704
        %1706 = vrot.lane.b32.xlu0 %v1288, 8
        %v1707 = vpop.permute.xlu0 %1706
        %1708 = vrot.lane.b32.xlu0 %v1289, 8
        %v1709 = vpop.permute.xlu0 %1708
        %1710 = vrot.lane.b32.xlu0 %v1290, 8
        %v1711 = vpop.permute.xlu0 %1710
        %1712 = vrot.lane.b32.xlu0 %v1291, 8
        %v1713 = vpop.permute.xlu0 %1712
        %1714 = vrot.lane.b32.xlu0 %v1292, 8
        %v1715 = vpop.permute.xlu0 %1714
        %1716 = vrot.lane.b32.xlu0 %v1293, 8
        %v1717 = vpop.permute.xlu0 %1716
        %1718 = vrot.lane.b32.xlu0 %v1294, 8
        %v1719 = vpop.permute.xlu0 %1718
        %1720 = vrot.lane.b32.xlu0 0.0, 8
        %v1721 = vpop.permute.xlu0 %1720
        %vm1754 = vcmask 1046528
        %v1755 = vrot.slane 0.0, 1
        %v1756 = vsel %vm1754, %v1755, %v1755
        %v1757 = vrot.slane %v719, 1
        %v1758 = vsel %vm1754, %v1755, %v1757
        %v1759 = vrot.slane %v625, 1
        %v1760 = vsel %vm1754, %v1757, %v1759
        %v1761 = vrot.slane %v627, 1
        %v1762 = vsel %vm1754, %v1759, %v1761
        %v1763 = vrot.slane %v629, 1
        %v1764 = vsel %vm1754, %v1761, %v1763
        %v1765 = vrot.slane %v631, 1
        %v1766 = vsel %vm1754, %v1763, %v1765
        %v1767 = vrot.slane %v633, 1
        %v1768 = vsel %vm1754, %v1765, %v1767
        %v1769 = vrot.slane %v635, 1
        %v1770 = vsel %vm1754, %v1767, %v1769
        %v1771 = vrot.slane %v637, 1
        %v1772 = vsel %vm1754, %v1769, %v1771
        %v1773 = vrot.slane %v639, 1
        %v1774 = vsel %vm1754, %v1771, %v1773
        %v1775 = vrot.slane %v641, 1
        %v1776 = vsel %vm1754, %v1773, %v1775
        %v1777 = vrot.slane %v643, 1
        %v1778 = vsel %vm1754, %v1775, %v1777
        %v1779 = vrot.slane %v645, 1
        %v1780 = vsel %vm1754, %v1777, %v1779
        %v1781 = vrot.slane %v647, 1
        %v1782 = vsel %vm1754, %v1779, %v1781
        %v1783 = vrot.slane %v649, 1
        %v1784 = vsel %vm1754, %v1781, %v1783
        %v1785 = vrot.slane %v651, 1
        %v1786 = vsel %vm1754, %v1783, %v1785
        %v1787 = vrot.slane %v653, 1
        %v1788 = vsel %vm1754, %v1785, %v1787
        %v1789 = vrot.slane %v655, 1
        %v1790 = vsel %vm1754, %v1787, %v1789
        %v1791 = vrot.slane %v657, 1
        %v1792 = vsel %vm1754, %v1789, %v1791
        %v1793 = vrot.slane %v659, 1
        %v1794 = vsel %vm1754, %v1791, %v1793
        %v1795 = vrot.slane %v661, 1
        %v1796 = vsel %vm1754, %v1793, %v1795
        %v1797 = vrot.slane %v663, 1
        %v1798 = vsel %vm1754, %v1795, %v1797
        %v1799 = vrot.slane %v665, 1
        %v1800 = vsel %vm1754, %v1797, %v1799
        %v1801 = vrot.slane %v667, 1
        %v1802 = vsel %vm1754, %v1799, %v1801
        %v1803 = vrot.slane %v669, 1
        %v1804 = vsel %vm1754, %v1801, %v1803
        %v1805 = vrot.slane %v671, 1
        %v1806 = vsel %vm1754, %v1803, %v1805
        %v1807 = vrot.slane %v673, 1
        %v1808 = vsel %vm1754, %v1805, %v1807
        %v1809 = vrot.slane %v675, 1
        %v1810 = vsel %vm1754, %v1807, %v1809
        %v1811 = vrot.slane %v677, 1
        %v1812 = vsel %vm1754, %v1809, %v1811
        %v1813 = vrot.slane %v679, 1
        %v1814 = vsel %vm1754, %v1811, %v1813
        %v1815 = vrot.slane %v681, 1
        %v1816 = vsel %vm1754, %v1813, %v1815
        %v1817 = vrot.slane %v683, 1
        %v1818 = vsel %vm1754, %v1815, %v1817
        %1819 = vrot.lane.b32.xlu0 %v1756, 12
        %v1820 = vpop.permute.xlu0 %1819
        %1821 = vrot.lane.b32.xlu0 %v1758, 12
        %v1822 = vpop.permute.xlu0 %1821
        %1823 = vrot.lane.b32.xlu0 %v1760, 12
        %v1824 = vpop.permute.xlu0 %1823
        %1825 = vrot.lane.b32.xlu0 %v1762, 12
        %v1826 = vpop.permute.xlu0 %1825
        %1827 = vrot.lane.b32.xlu0 %v1764, 12
        %v1828 = vpop.permute.xlu0 %1827
        %1829 = vrot.lane.b32.xlu0 %v1766, 12
        %v1830 = vpop.permute.xlu0 %1829
        %1831 = vrot.lane.b32.xlu0 %v1768, 12
        %v1832 = vpop.permute.xlu0 %1831
        %1833 = vrot.lane.b32.xlu0 %v1770, 12
        %v1834 = vpop.permute.xlu0 %1833
        %1835 = vrot.lane.b32.xlu0 %v1772, 12
        %v1836 = vpop.permute.xlu0 %1835
        %1837 = vrot.lane.b32.xlu0 %v1774, 12
        %v1838 = vpop.permute.xlu0 %1837
        %1839 = vrot.lane.b32.xlu0 %v1776, 12
        %v1840 = vpop.permute.xlu0 %1839
        %1841 = vrot.lane.b32.xlu0 %v1778, 12
        %v1842 = vpop.permute.xlu0 %1841
        %1843 = vrot.lane.b32.xlu0 %v1780, 12
        %v1844 = vpop.permute.xlu0 %1843
        %1845 = vrot.lane.b32.xlu0 %v1782, 12
        %v1846 = vpop.permute.xlu0 %1845
        %1847 = vrot.lane.b32.xlu0 %v1784, 12
        %v1848 = vpop.permute.xlu0 %1847
        %1849 = vrot.lane.b32.xlu0 %v1786, 12
        %v1850 = vpop.permute.xlu0 %1849
        %1851 = vrot.lane.b32.xlu0 %v1788, 12
        %v1852 = vpop.permute.xlu0 %1851
        %1853 = vrot.lane.b32.xlu0 %v1790, 12
        %v1854 = vpop.permute.xlu0 %1853
        %1855 = vrot.lane.b32.xlu0 %v1792, 12
        %v1856 = vpop.permute.xlu0 %1855
        %1857 = vrot.lane.b32.xlu0 %v1794, 12
        %v1858 = vpop.permute.xlu0 %1857
        %1859 = vrot.lane.b32.xlu0 %v1796, 12
        %v1860 = vpop.permute.xlu0 %1859
        %1861 = vrot.lane.b32.xlu0 %v1798, 12
        %v1862 = vpop.permute.xlu0 %1861
        %1863 = vrot.lane.b32.xlu0 %v1800, 12
        %v1864 = vpop.permute.xlu0 %1863
        %1865 = vrot.lane.b32.xlu0 %v1802, 12
        %v1866 = vpop.permute.xlu0 %1865
        %1867 = vrot.lane.b32.xlu0 %v1804, 12
        %v1868 = vpop.permute.xlu0 %1867
        %1869 = vrot.lane.b32.xlu0 %v1806, 12
        %v1870 = vpop.permute.xlu0 %1869
        %1871 = vrot.lane.b32.xlu0 %v1808, 12
        %v1872 = vpop.permute.xlu0 %1871
        %1873 = vrot.lane.b32.xlu0 %v1810, 12
        %v1874 = vpop.permute.xlu0 %1873
        %1875 = vrot.lane.b32.xlu0 %v1812, 12
        %v1876 = vpop.permute.xlu0 %1875
        %1877 = vrot.lane.b32.xlu0 %v1814, 12
        %v1878 = vpop.permute.xlu0 %1877
        %1879 = vrot.lane.b32.xlu0 %v1816, 12
        %v1880 = vpop.permute.xlu0 %1879
        %1881 = vrot.lane.b32.xlu0 %v1818, 12
        %v1882 = vpop.permute.xlu0 %1881
        %v1915 = vrot.slane %v685, 1
        %v1916 = vsel %vm1754, %v1817, %v1915
        %v1917 = vrot.slane %v720, 1
        %v1918 = vsel %vm1754, %v1915, %v1917
        %1919 = vrot.lane.b32.xlu0 %v1760, 16
        %v1920 = vpop.permute.xlu0 %1919
        %1921 = vrot.lane.b32.xlu0 %v1762, 16
        %v1922 = vpop.permute.xlu0 %1921
        %1923 = vrot.lane.b32.xlu0 %v1764, 16
        %v1924 = vpop.permute.xlu0 %1923
        %1925 = vrot.lane.b32.xlu0 %v1766, 16
        %v1926 = vpop.permute.xlu0 %1925
        %1927 = vrot.lane.b32.xlu0 %v1768, 16
        %v1928 = vpop.permute.xlu0 %1927
        %1929 = vrot.lane.b32.xlu0 %v1770, 16
        %v1930 = vpop.permute.xlu0 %1929
        %1931 = vrot.lane.b32.xlu0 %v1772, 16
        %v1932 = vpop.permute.xlu0 %1931
        %1933 = vrot.lane.b32.xlu0 %v1774, 16
        %v1934 = vpop.permute.xlu0 %1933
        %1935 = vrot.lane.b32.xlu0 %v1776, 16
        %v1936 = vpop.permute.xlu0 %1935
        %1937 = vrot.lane.b32.xlu0 %v1778, 16
        %v1938 = vpop.permute.xlu0 %1937
        %1939 = vrot.lane.b32.xlu0 %v1780, 16
        %v1940 = vpop.permute.xlu0 %1939
        %1941 = vrot.lane.b32.xlu0 %v1782, 16
        %v1942 = vpop.permute.xlu0 %1941
        %1943 = vrot.lane.b32.xlu0 %v1784, 16
        %v1944 = vpop.permute.xlu0 %1943
        %1945 = vrot.lane.b32.xlu0 %v1786, 16
        %v1946 = vpop.permute.xlu0 %1945
        %1947 = vrot.lane.b32.xlu0 %v1788, 16
        %v1948 = vpop.permute.xlu0 %1947
        %1949 = vrot.lane.b32.xlu0 %v1790, 16
        %v1950 = vpop.permute.xlu0 %1949
        %1951 = vrot.lane.b32.xlu0 %v1792, 16
        %v1952 = vpop.permute.xlu0 %1951
        %1953 = vrot.lane.b32.xlu0 %v1794, 16
        %v1954 = vpop.permute.xlu0 %1953
        %1955 = vrot.lane.b32.xlu0 %v1796, 16
        %v1956 = vpop.permute.xlu0 %1955
        %1957 = vrot.lane.b32.xlu0 %v1798, 16
        %v1958 = vpop.permute.xlu0 %1957
        %1959 = vrot.lane.b32.xlu0 %v1800, 16
        %v1960 = vpop.permute.xlu0 %1959
        %1961 = vrot.lane.b32.xlu0 %v1802, 16
        %v1962 = vpop.permute.xlu0 %1961
        %1963 = vrot.lane.b32.xlu0 %v1804, 16
        %v1964 = vpop.permute.xlu0 %1963
        %1965 = vrot.lane.b32.xlu0 %v1806, 16
        %v1966 = vpop.permute.xlu0 %1965
        %1967 = vrot.lane.b32.xlu0 %v1808, 16
        %v1968 = vpop.permute.xlu0 %1967
        %1969 = vrot.lane.b32.xlu0 %v1810, 16
        %v1970 = vpop.permute.xlu0 %1969
        %1971 = vrot.lane.b32.xlu0 %v1812, 16
        %v1972 = vpop.permute.xlu0 %1971
        %1973 = vrot.lane.b32.xlu0 %v1814, 16
        %v1974 = vpop.permute.xlu0 %1973
        %1975 = vrot.lane.b32.xlu0 %v1816, 16
        %v1976 = vpop.permute.xlu0 %1975
        %1977 = vrot.lane.b32.xlu0 %v1818, 16
        %v1978 = vpop.permute.xlu0 %1977
        %1979 = vrot.lane.b32.xlu0 %v1916, 16
        %v1980 = vpop.permute.xlu0 %1979
        %1981 = vrot.lane.b32.xlu0 %v1918, 16
        %v1982 = vpop.permute.xlu0 %1981
        %v2015 = vsel %vm1754, %v1917, %v1755
        %2016 = vrot.lane.b32.xlu0 %v1764, 20
        %v2017 = vpop.permute.xlu0 %2016
        %2018 = vrot.lane.b32.xlu0 %v1766, 20
        %v2019 = vpop.permute.xlu0 %2018
        %2020 = vrot.lane.b32.xlu0 %v1768, 20
        %v2021 = vpop.permute.xlu0 %2020
        %2022 = vrot.lane.b32.xlu0 %v1770, 20
        %v2023 = vpop.permute.xlu0 %2022
        %2024 = vrot.lane.b32.xlu0 %v1772, 20
        %v2025 = vpop.permute.xlu0 %2024
        %2026 = vrot.lane.b32.xlu0 %v1774, 20
        %v2027 = vpop.permute.xlu0 %2026
        %2028 = vrot.lane.b32.xlu0 %v1776, 20
        %v2029 = vpop.permute.xlu0 %2028
        %2030 = vrot.lane.b32.xlu0 %v1778, 20
        %v2031 = vpop.permute.xlu0 %2030
        %2032 = vrot.lane.b32.xlu0 %v1780, 20
        %v2033 = vpop.permute.xlu0 %2032
        %2034 = vrot.lane.b32.xlu0 %v1782, 20
        %v2035 = vpop.permute.xlu0 %2034
        %2036 = vrot.lane.b32.xlu0 %v1784, 20
        %v2037 = vpop.permute.xlu0 %2036
        %2038 = vrot.lane.b32.xlu0 %v1786, 20
        %v2039 = vpop.permute.xlu0 %2038
        %2040 = vrot.lane.b32.xlu0 %v1788, 20
        %v2041 = vpop.permute.xlu0 %2040
        %2042 = vrot.lane.b32.xlu0 %v1790, 20
        %v2043 = vpop.permute.xlu0 %2042
        %2044 = vrot.lane.b32.xlu0 %v1792, 20
        %v2045 = vpop.permute.xlu0 %2044
        %2046 = vrot.lane.b32.xlu0 %v1794, 20
        %v2047 = vpop.permute.xlu0 %2046
        %2048 = vrot.lane.b32.xlu0 %v1796, 20
        %v2049 = vpop.permute.xlu0 %2048
        %2050 = vrot.lane.b32.xlu0 %v1798, 20
        %v2051 = vpop.permute.xlu0 %2050
        %2052 = vrot.lane.b32.xlu0 %v1800, 20
        %v2053 = vpop.permute.xlu0 %2052
        %2054 = vrot.lane.b32.xlu0 %v1802, 20
        %v2055 = vpop.permute.xlu0 %2054
        %2056 = vrot.lane.b32.xlu0 %v1804, 20
        %v2057 = vpop.permute.xlu0 %2056
        %2058 = vrot.lane.b32.xlu0 %v1806, 20
        %v2059 = vpop.permute.xlu0 %2058
        %2060 = vrot.lane.b32.xlu0 %v1808, 20
        %v2061 = vpop.permute.xlu0 %2060
        %2062 = vrot.lane.b32.xlu0 %v1810, 20
        %v2063 = vpop.permute.xlu0 %2062
        %2064 = vrot.lane.b32.xlu0 %v1812, 20
        %v2065 = vpop.permute.xlu0 %2064
        %2066 = vrot.lane.b32.xlu0 %v1814, 20
        %v2067 = vpop.permute.xlu0 %2066
        %2068 = vrot.lane.b32.xlu0 %v1816, 20
        %v2069 = vpop.permute.xlu0 %2068
        %2070 = vrot.lane.b32.xlu0 %v1818, 20
        %v2071 = vpop.permute.xlu0 %2070
        %2072 = vrot.lane.b32.xlu0 %v1916, 20
        %v2073 = vpop.permute.xlu0 %2072
        %2074 = vrot.lane.b32.xlu0 %v1918, 20
        %v2075 = vpop.permute.xlu0 %2074
        %2076 = vrot.lane.b32.xlu0 %v2015, 20
        %v2077 = vpop.permute.xlu0 %2076
        %2078 = vrot.lane.b32.xlu0 %v1756, 20
        %v2079 = vpop.permute.xlu0 %2078
        %2144 = vrot.lane.b32.xlu0 %v1394, 24
        %v2145 = vpop.permute.xlu0 %2144
        %2146 = vrot.lane.b32.xlu0 %v1395, 24
        %v2147 = vpop.permute.xlu0 %2146
        %2148 = vrot.lane.b32.xlu0 %v1396, 24
        %v2149 = vpop.permute.xlu0 %2148
        %2150 = vrot.lane.b32.xlu0 %v1397, 24
        %v2151 = vpop.permute.xlu0 %2150
        %2152 = vrot.lane.b32.xlu0 %v1398, 24
        %v2153 = vpop.permute.xlu0 %2152
        %2154 = vrot.lane.b32.xlu0 %v1399, 24
        %v2155 = vpop.permute.xlu0 %2154
        %2156 = vrot.lane.b32.xlu0 %v1400, 24
        %v2157 = vpop.permute.xlu0 %2156
        %2158 = vrot.lane.b32.xlu0 %v1401, 24
        %v2159 = vpop.permute.xlu0 %2158
        %2160 = vrot.lane.b32.xlu0 %v1402, 24
        %v2161 = vpop.permute.xlu0 %2160
        %2162 = vrot.lane.b32.xlu0 %v1403, 24
        %v2163 = vpop.permute.xlu0 %2162
        %2164 = vrot.lane.b32.xlu0 %v1404, 24
        %v2165 = vpop.permute.xlu0 %2164
        %2166 = vrot.lane.b32.xlu0 %v1405, 24
        %v2167 = vpop.permute.xlu0 %2166
        %2168 = vrot.lane.b32.xlu0 %v1406, 24
        %v2169 = vpop.permute.xlu0 %2168
        %2170 = vrot.lane.b32.xlu0 %v1407, 24
        %v2171 = vpop.permute.xlu0 %2170
        %2172 = vrot.lane.b32.xlu0 %v1408, 24
        %v2173 = vpop.permute.xlu0 %2172
        %2174 = vrot.lane.b32.xlu0 %v1409, 24
        %v2175 = vpop.permute.xlu0 %2174
        %2176 = vrot.lane.b32.xlu0 %v1410, 24
        %v2177 = vpop.permute.xlu0 %2176
        %2178 = vrot.lane.b32.xlu0 %v1411, 24
        %v2179 = vpop.permute.xlu0 %2178
        %2180 = vrot.lane.b32.xlu0 %v1412, 24
        %v2181 = vpop.permute.xlu0 %2180
        %2182 = vrot.lane.b32.xlu0 %v1413, 24
        %v2183 = vpop.permute.xlu0 %2182
        %2184 = vrot.lane.b32.xlu0 %v1414, 24
        %v2185 = vpop.permute.xlu0 %2184
        %2186 = vrot.lane.b32.xlu0 %v1415, 24
        %v2187 = vpop.permute.xlu0 %2186
        %2188 = vrot.lane.b32.xlu0 %v1416, 24
        %v2189 = vpop.permute.xlu0 %2188
        %2190 = vrot.lane.b32.xlu0 %v1417, 24
        %v2191 = vpop.permute.xlu0 %2190
        %2192 = vrot.lane.b32.xlu0 %v1418, 24
        %v2193 = vpop.permute.xlu0 %2192
        %2194 = vrot.lane.b32.xlu0 %v1419, 24
        %v2195 = vpop.permute.xlu0 %2194
        %2196 = vrot.lane.b32.xlu0 %v1420, 24
        %v2197 = vpop.permute.xlu0 %2196
        %2198 = vrot.lane.b32.xlu0 %v1421, 24
        %v2199 = vpop.permute.xlu0 %2198
        %2200 = vrot.lane.b32.xlu0 %v1422, 24
        %v2201 = vpop.permute.xlu0 %2200
        %2202 = vrot.lane.b32.xlu0 %v1423, 24
        %v2203 = vpop.permute.xlu0 %2202
        %2204 = vrot.lane.b32.xlu0 %v1424, 24
        %v2205 = vpop.permute.xlu0 %2204
        %2206 = vrot.lane.b32.xlu0 %v1425, 24
        %v2207 = vpop.permute.xlu0 %2206
        %2272 = vrot.lane.b32.xlu0 %v1433, 28
        %v2273 = vpop.permute.xlu0 %2272
        %2274 = vrot.lane.b32.xlu0 %v1434, 28
        %v2275 = vpop.permute.xlu0 %2274
        %2276 = vrot.lane.b32.xlu0 %v1435, 28
        %v2277 = vpop.permute.xlu0 %2276
        %2278 = vrot.lane.b32.xlu0 %v1436, 28
        %v2279 = vpop.permute.xlu0 %2278
        %2280 = vrot.lane.b32.xlu0 %v1437, 28
        %v2281 = vpop.permute.xlu0 %2280
        %2282 = vrot.lane.b32.xlu0 %v1438, 28
        %v2283 = vpop.permute.xlu0 %2282
        %2284 = vrot.lane.b32.xlu0 %v1439, 28
        %v2285 = vpop.permute.xlu0 %2284
        %2286 = vrot.lane.b32.xlu0 %v1440, 28
        %v2287 = vpop.permute.xlu0 %2286
        %2288 = vrot.lane.b32.xlu0 %v1441, 28
        %v2289 = vpop.permute.xlu0 %2288
        %2290 = vrot.lane.b32.xlu0 %v1442, 28
        %v2291 = vpop.permute.xlu0 %2290
        %2292 = vrot.lane.b32.xlu0 %v1443, 28
        %v2293 = vpop.permute.xlu0 %2292
        %2294 = vrot.lane.b32.xlu0 %v1444, 28
        %v2295 = vpop.permute.xlu0 %2294
        %2296 = vrot.lane.b32.xlu0 %v1445, 28
        %v2297 = vpop.permute.xlu0 %2296
        %2298 = vrot.lane.b32.xlu0 %v1446, 28
        %v2299 = vpop.permute.xlu0 %2298
        %2300 = vrot.lane.b32.xlu0 %v1447, 28
        %v2301 = vpop.permute.xlu0 %2300
        %2302 = vrot.lane.b32.xlu0 %v1448, 28
        %v2303 = vpop.permute.xlu0 %2302
        %2304 = vrot.lane.b32.xlu0 %v1449, 28
        %v2305 = vpop.permute.xlu0 %2304
        %2306 = vrot.lane.b32.xlu0 %v1450, 28
        %v2307 = vpop.permute.xlu0 %2306
        %2308 = vrot.lane.b32.xlu0 %v1451, 28
        %v2309 = vpop.permute.xlu0 %2308
        %2310 = vrot.lane.b32.xlu0 %v1452, 28
        %v2311 = vpop.permute.xlu0 %2310
        %2312 = vrot.lane.b32.xlu0 %v1453, 28
        %v2313 = vpop.permute.xlu0 %2312
        %2314 = vrot.lane.b32.xlu0 %v1454, 28
        %v2315 = vpop.permute.xlu0 %2314
        %2316 = vrot.lane.b32.xlu0 %v1455, 28
        %v2317 = vpop.permute.xlu0 %2316
        %2318 = vrot.lane.b32.xlu0 %v1456, 28
        %v2319 = vpop.permute.xlu0 %2318
        %2320 = vrot.lane.b32.xlu0 %v1457, 28
        %v2321 = vpop.permute.xlu0 %2320
        %2322 = vrot.lane.b32.xlu0 %v1458, 28
        %v2323 = vpop.permute.xlu0 %2322
        %2324 = vrot.lane.b32.xlu0 %v1459, 28
        %v2325 = vpop.permute.xlu0 %2324
        %2326 = vrot.lane.b32.xlu0 %v1460, 28
        %v2327 = vpop.permute.xlu0 %2326
        %2328 = vrot.lane.b32.xlu0 %v1461, 28
        %v2329 = vpop.permute.xlu0 %2328
        %2330 = vrot.lane.b32.xlu0 %v1462, 28
        %v2331 = vpop.permute.xlu0 %2330
        %2332 = vrot.lane.b32.xlu0 %v1463, 28
        %v2333 = vpop.permute.xlu0 %2332
        %2334 = vrot.lane.b32.xlu0 %v1464, 28
        %v2335 = vpop.permute.xlu0 %2334
        %2400 = vrot.lane.b32.xlu0 %v1467, 32
        %v2401 = vpop.permute.xlu0 %2400
        %2402 = vrot.lane.b32.xlu0 %v1468, 32
        %v2403 = vpop.permute.xlu0 %2402
        %2404 = vrot.lane.b32.xlu0 %v1469, 32
        %v2405 = vpop.permute.xlu0 %2404
        %2406 = vrot.lane.b32.xlu0 %v1470, 32
        %v2407 = vpop.permute.xlu0 %2406
        %2408 = vrot.lane.b32.xlu0 %v1471, 32
        %v2409 = vpop.permute.xlu0 %2408
        %2410 = vrot.lane.b32.xlu0 %v1472, 32
        %v2411 = vpop.permute.xlu0 %2410
        %2412 = vrot.lane.b32.xlu0 %v1473, 32
        %v2413 = vpop.permute.xlu0 %2412
        %2414 = vrot.lane.b32.xlu0 %v1474, 32
        %v2415 = vpop.permute.xlu0 %2414
        %2416 = vrot.lane.b32.xlu0 %v1475, 32
        %v2417 = vpop.permute.xlu0 %2416
        %2418 = vrot.lane.b32.xlu0 %v1476, 32
        %v2419 = vpop.permute.xlu0 %2418
        %2420 = vrot.lane.b32.xlu0 %v1477, 32
        %v2421 = vpop.permute.xlu0 %2420
        %2422 = vrot.lane.b32.xlu0 %v1478, 32
        %v2423 = vpop.permute.xlu0 %2422
        %2424 = vrot.lane.b32.xlu0 %v1479, 32
        %v2425 = vpop.permute.xlu0 %2424
        %2426 = vrot.lane.b32.xlu0 %v1480, 32
        %v2427 = vpop.permute.xlu0 %2426
        %2428 = vrot.lane.b32.xlu0 %v1481, 32
        %v2429 = vpop.permute.xlu0 %2428
        %2430 = vrot.lane.b32.xlu0 %v1482, 32
        %v2431 = vpop.permute.xlu0 %2430
        %2432 = vrot.lane.b32.xlu0 %v1483, 32
        %v2433 = vpop.permute.xlu0 %2432
        %2434 = vrot.lane.b32.xlu0 %v1484, 32
        %v2435 = vpop.permute.xlu0 %2434
        %2436 = vrot.lane.b32.xlu0 %v1485, 32
        %v2437 = vpop.permute.xlu0 %2436
        %2438 = vrot.lane.b32.xlu0 %v1486, 32
        %v2439 = vpop.permute.xlu0 %2438
        %2440 = vrot.lane.b32.xlu0 %v1487, 32
        %v2441 = vpop.permute.xlu0 %2440
        %2442 = vrot.lane.b32.xlu0 %v1488, 32
        %v2443 = vpop.permute.xlu0 %2442
        %2444 = vrot.lane.b32.xlu0 %v1489, 32
        %v2445 = vpop.permute.xlu0 %2444
        %2446 = vrot.lane.b32.xlu0 %v1490, 32
        %v2447 = vpop.permute.xlu0 %2446
        %2448 = vrot.lane.b32.xlu0 %v1491, 32
        %v2449 = vpop.permute.xlu0 %2448
        %2450 = vrot.lane.b32.xlu0 %v1492, 32
        %v2451 = vpop.permute.xlu0 %2450
        %2452 = vrot.lane.b32.xlu0 %v1493, 32
        %v2453 = vpop.permute.xlu0 %2452
        %2454 = vrot.lane.b32.xlu0 %v1494, 32
        %v2455 = vpop.permute.xlu0 %2454
        %2456 = vrot.lane.b32.xlu0 %v1495, 32
        %v2457 = vpop.permute.xlu0 %2456
        %2458 = vrot.lane.b32.xlu0 %v1496, 32
        %v2459 = vpop.permute.xlu0 %2458
        %2460 = vrot.lane.b32.xlu0 %v1497, 32
        %v2461 = vpop.permute.xlu0 %2460
        %2462 = vrot.lane.b32.xlu0 %v1498, 32
        %v2463 = vpop.permute.xlu0 %2462
        %vm2496 = vcmask 31744
        %v2497 = vsel %vm2496, 0.0, %v1532
        %v2498 = vsel %vm2496, 0.0, %v1534
        %v2499 = vsel %vm2496, %v1202, %v1536
        %v2500 = vsel %vm2496, %v1203, %v1538
        %v2501 = vsel %vm2496, %v1204, %v1540
        %v2502 = vsel %vm2496, %v1205, %v1542
        %v2503 = vsel %vm2496, %v1206, %v1544
        %v2504 = vsel %vm2496, %v1207, %v1546
        %v2505 = vsel %vm2496, %v1208, %v1548
        %v2506 = vsel %vm2496, %v1209, %v1550
        %v2507 = vsel %vm2496, %v1210, %v1552
        %v2508 = vsel %vm2496, %v1211, %v1554
        %v2509 = vsel %vm2496, %v1212, %v1556
        %v2510 = vsel %vm2496, %v1213, %v1558
        %v2511 = vsel %vm2496, %v1214, %v1560
        %v2512 = vsel %vm2496, %v1215, %v1562
        %v2513 = vsel %vm2496, %v1216, %v1564
        %v2514 = vsel %vm2496, %v1217, %v1566
        %v2515 = vsel %vm2496, %v1218, %v1568
        %v2516 = vsel %vm2496, %v1219, %v1570
        %v2517 = vsel %vm2496, %v1220, %v1572
        %v2518 = vsel %vm2496, %v1221, %v1574
        %v2519 = vsel %vm2496, %v1222, %v1576
        %v2520 = vsel %vm2496, %v1223, %v1578
        %v2521 = vsel %vm2496, %v1224, %v1580
        %v2522 = vsel %vm2496, %v1225, %v1582
        %v2523 = vsel %vm2496, %v1226, %v1584
        %v2524 = vsel %vm2496, %v1227, %v1586
        %v2525 = vsel %vm2496, %v1228, %v1588
        %v2526 = vsel %vm2496, %v1229, %v1590
        %v2527 = vsel %vm2496, %v1230, %v1592
        %v2528 = vsel %vm2496, %v1231, %v1594
        %vm2529 = vcmask 64512
        %v2530 = vsel %vm2529, %v2497, %v1659
        %v2531 = vsel %vm2529, %v2498, %v1661
        %v2532 = vsel %vm2529, %v2499, %v1663
        %v2533 = vsel %vm2529, %v2500, %v1665
        %v2534 = vsel %vm2529, %v2501, %v1667
        %v2535 = vsel %vm2529, %v2502, %v1669
        %v2536 = vsel %vm2529, %v2503, %v1671
        %v2537 = vsel %vm2529, %v2504, %v1673
        %v2538 = vsel %vm2529, %v2505, %v1675
        %v2539 = vsel %vm2529, %v2506, %v1677
        %v2540 = vsel %vm2529, %v2507, %v1679
        %v2541 = vsel %vm2529, %v2508, %v1681
        %v2542 = vsel %vm2529, %v2509, %v1683
        %v2543 = vsel %vm2529, %v2510, %v1685
        %v2544 = vsel %vm2529, %v2511, %v1687
        %v2545 = vsel %vm2529, %v2512, %v1689
        %v2546 = vsel %vm2529, %v2513, %v1691
        %v2547 = vsel %vm2529, %v2514, %v1693
        %v2548 = vsel %vm2529, %v2515, %v1695
        %v2549 = vsel %vm2529, %v2516, %v1697
        %v2550 = vsel %vm2529, %v2517, %v1699
        %v2551 = vsel %vm2529, %v2518, %v1701
        %v2552 = vsel %vm2529, %v2519, %v1703
        %v2553 = vsel %vm2529, %v2520, %v1705
        %v2554 = vsel %vm2529, %v2521, %v1707
        %v2555 = vsel %vm2529, %v2522, %v1709
        %v2556 = vsel %vm2529, %v2523, %v1711
        %v2557 = vsel %vm2529, %v2524, %v1713
        %v2558 = vsel %vm2529, %v2525, %v1715
        %v2559 = vsel %vm2529, %v2526, %v1717
        %v2560 = vsel %vm2529, %v2527, %v1719
        %v2561 = vsel %vm2529, %v2528, %v1721
        %vm2562 = vcmask 97280
        %v2563 = vsel %vm2562, %v2530, %v1820
        %v2564 = vsel %vm2562, %v2531, %v1822
        %v2565 = vsel %vm2562, %v2532, %v1824
        %v2566 = vsel %vm2562, %v2533, %v1826
        %v2567 = vsel %vm2562, %v2534, %v1828
        %v2568 = vsel %vm2562, %v2535, %v1830
        %v2569 = vsel %vm2562, %v2536, %v1832
        %v2570 = vsel %vm2562, %v2537, %v1834
        %v2571 = vsel %vm2562, %v2538, %v1836
        %v2572 = vsel %vm2562, %v2539, %v1838
        %v2573 = vsel %vm2562, %v2540, %v1840
        %v2574 = vsel %vm2562, %v2541, %v1842
        %v2575 = vsel %vm2562, %v2542, %v1844
        %v2576 = vsel %vm2562, %v2543, %v1846
        %v2577 = vsel %vm2562, %v2544, %v1848
        %v2578 = vsel %vm2562, %v2545, %v1850
        %v2579 = vsel %vm2562, %v2546, %v1852
        %v2580 = vsel %vm2562, %v2547, %v1854
        %v2581 = vsel %vm2562, %v2548, %v1856
        %v2582 = vsel %vm2562, %v2549, %v1858
        %v2583 = vsel %vm2562, %v2550, %v1860
        %v2584 = vsel %vm2562, %v2551, %v1862
        %v2585 = vsel %vm2562, %v2552, %v1864
        %v2586 = vsel %vm2562, %v2553, %v1866
        %v2587 = vsel %vm2562, %v2554, %v1868
        %v2588 = vsel %vm2562, %v2555, %v1870
        %v2589 = vsel %vm2562, %v2556, %v1872
        %v2590 = vsel %vm2562, %v2557, %v1874
        %v2591 = vsel %vm2562, %v2558, %v1876
        %v2592 = vsel %vm2562, %v2559, %v1878
        %v2593 = vsel %vm2562, %v2560, %v1880
        %v2594 = vsel %vm2562, %v2561, %v1882
        %v2595 = vsel %vm420, %v2563, %v1920
        %v2596 = vsel %vm420, %v2564, %v1922
        %v2597 = vsel %vm420, %v2565, %v1924
        %v2598 = vsel %vm420, %v2566, %v1926
        %v2599 = vsel %vm420, %v2567, %v1928
        %v2600 = vsel %vm420, %v2568, %v1930
        %v2601 = vsel %vm420, %v2569, %v1932
        %v2602 = vsel %vm420, %v2570, %v1934
        %v2603 = vsel %vm420, %v2571, %v1936
        %v2604 = vsel %vm420, %v2572, %v1938
        %v2605 = vsel %vm420, %v2573, %v1940
        %v2606 = vsel %vm420, %v2574, %v1942
        %v2607 = vsel %vm420, %v2575, %v1944
        %v2608 = vsel %vm420, %v2576, %v1946
        %v2609 = vsel %vm420, %v2577, %v1948
        %v2610 = vsel %vm420, %v2578, %v1950
        %v2611 = vsel %vm420, %v2579, %v1952
        %v2612 = vsel %vm420, %v2580, %v1954
        %v2613 = vsel %vm420, %v2581, %v1956
        %v2614 = vsel %vm420, %v2582, %v1958
        %v2615 = vsel %vm420, %v2583, %v1960
        %v2616 = vsel %vm420, %v2584, %v1962
        %v2617 = vsel %vm420, %v2585, %v1964
        %v2618 = vsel %vm420, %v2586, %v1966
        %v2619 = vsel %vm420, %v2587, %v1968
        %v2620 = vsel %vm420, %v2588, %v1970
        %v2621 = vsel %vm420, %v2589, %v1972
        %v2622 = vsel %vm420, %v2590, %v1974
        %v2623 = vsel %vm420, %v2591, %v1976
        %v2624 = vsel %vm420, %v2592, %v1978
        %v2625 = vsel %vm420, %v2593, %v1980
        %v2626 = vsel %vm420, %v2594, %v1982
        %vm2627 = vcmask 162816
        %v2628 = vsel %vm2627, %v2595, %v2017
        %v2629 = vsel %vm2627, %v2596, %v2019
        %v2630 = vsel %vm2627, %v2597, %v2021
        %v2631 = vsel %vm2627, %v2598, %v2023
        %v2632 = vsel %vm2627, %v2599, %v2025
        %v2633 = vsel %vm2627, %v2600, %v2027
        %v2634 = vsel %vm2627, %v2601, %v2029
        %v2635 = vsel %vm2627, %v2602, %v2031
        %v2636 = vsel %vm2627, %v2603, %v2033
        %v2637 = vsel %vm2627, %v2604, %v2035
        %v2638 = vsel %vm2627, %v2605, %v2037
        %v2639 = vsel %vm2627, %v2606, %v2039
        %v2640 = vsel %vm2627, %v2607, %v2041
        %v2641 = vsel %vm2627, %v2608, %v2043
        %v2642 = vsel %vm2627, %v2609, %v2045
        %v2643 = vsel %vm2627, %v2610, %v2047
        %v2644 = vsel %vm2627, %v2611, %v2049
        %v2645 = vsel %vm2627, %v2612, %v2051
        %v2646 = vsel %vm2627, %v2613, %v2053
        %v2647 = vsel %vm2627, %v2614, %v2055
        %v2648 = vsel %vm2627, %v2615, %v2057
        %v2649 = vsel %vm2627, %v2616, %v2059
        %v2650 = vsel %vm2627, %v2617, %v2061
        %v2651 = vsel %vm2627, %v2618, %v2063
        %v2652 = vsel %vm2627, %v2619, %v2065
        %v2653 = vsel %vm2627, %v2620, %v2067
        %v2654 = vsel %vm2627, %v2621, %v2069
        %v2655 = vsel %vm2627, %v2622, %v2071
        %v2656 = vsel %vm2627, %v2623, %v2073
        %v2657 = vsel %vm2627, %v2624, %v2075
        %v2658 = vsel %vm2627, %v2625, %v2077
        %v2659 = vsel %vm2627, %v2626, %v2079
        %vm2660 = vcmask 195584
        %v2661 = vsel %vm2660, %v2628, %v2145
        %v2662 = vsel %vm2660, %v2629, %v2147
        %v2663 = vsel %vm2660, %v2630, %v2149
        %v2664 = vsel %vm2660, %v2631, %v2151
        %v2665 = vsel %vm2660, %v2632, %v2153
        %v2666 = vsel %vm2660, %v2633, %v2155
        %v2667 = vsel %vm2660, %v2634, %v2157
        %v2668 = vsel %vm2660, %v2635, %v2159
        %v2669 = vsel %vm2660, %v2636, %v2161
        %v2670 = vsel %vm2660, %v2637, %v2163
        %v2671 = vsel %vm2660, %v2638, %v2165
        %v2672 = vsel %vm2660, %v2639, %v2167
        %v2673 = vsel %vm2660, %v2640, %v2169
        %v2674 = vsel %vm2660, %v2641, %v2171
        %v2675 = vsel %vm2660, %v2642, %v2173
        %v2676 = vsel %vm2660, %v2643, %v2175
        %v2677 = vsel %vm2660, %v2644, %v2177
        %v2678 = vsel %vm2660, %v2645, %v2179
        %v2679 = vsel %vm2660, %v2646, %v2181
        %v2680 = vsel %vm2660, %v2647, %v2183
        %v2681 = vsel %vm2660, %v2648, %v2185
        %v2682 = vsel %vm2660, %v2649, %v2187
        %v2683 = vsel %vm2660, %v2650, %v2189
        %v2684 = vsel %vm2660, %v2651, %v2191
        %v2685 = vsel %vm2660, %v2652, %v2193
        %v2686 = vsel %vm2660, %v2653, %v2195
        %v2687 = vsel %vm2660, %v2654, %v2197
        %v2688 = vsel %vm2660, %v2655, %v2199
        %v2689 = vsel %vm2660, %v2656, %v2201
        %v2690 = vsel %vm2660, %v2657, %v2203
        %v2691 = vsel %vm2660, %v2658, %v2205
        %v2692 = vsel %vm2660, %v2659, %v2207
        %vm2693 = vcmask 228352
        %v2694 = vsel %vm2693, %v2661, %v2273
        %v2695 = vsel %vm2693, %v2662, %v2275
        %v2696 = vsel %vm2693, %v2663, %v2277
        %v2697 = vsel %vm2693, %v2664, %v2279
        %v2698 = vsel %vm2693, %v2665, %v2281
        %v2699 = vsel %vm2693, %v2666, %v2283
        %v2700 = vsel %vm2693, %v2667, %v2285
        %v2701 = vsel %vm2693, %v2668, %v2287
        %v2702 = vsel %vm2693, %v2669, %v2289
        %v2703 = vsel %vm2693, %v2670, %v2291
        %v2704 = vsel %vm2693, %v2671, %v2293
        %v2705 = vsel %vm2693, %v2672, %v2295
        %v2706 = vsel %vm2693, %v2673, %v2297
        %v2707 = vsel %vm2693, %v2674, %v2299
        %v2708 = vsel %vm2693, %v2675, %v2301
        %v2709 = vsel %vm2693, %v2676, %v2303
        %v2710 = vsel %vm2693, %v2677, %v2305
        %v2711 = vsel %vm2693, %v2678, %v2307
        %v2712 = vsel %vm2693, %v2679, %v2309
        %v2713 = vsel %vm2693, %v2680, %v2311
        %v2714 = vsel %vm2693, %v2681, %v2313
        %v2715 = vsel %vm2693, %v2682, %v2315
        %v2716 = vsel %vm2693, %v2683, %v2317
        %v2717 = vsel %vm2693, %v2684, %v2319
        %v2718 = vsel %vm2693, %v2685, %v2321
        %v2719 = vsel %vm2693, %v2686, %v2323
        %v2720 = vsel %vm2693, %v2687, %v2325
        %v2721 = vsel %vm2693, %v2688, %v2327
        %v2722 = vsel %vm2693, %v2689, %v2329
        %v2723 = vsel %vm2693, %v2690, %v2331
        %v2724 = vsel %vm2693, %v2691, %v2333
        %v2725 = vsel %vm2693, %v2692, %v2335
        %vm2726 = vcmask 261120
        %v2727 = vsel %vm2726, %v2694, %v2401
        %v2728 = vsel %vm2726, %v2695, %v2403
        %v2729 = vsel %vm2726, %v2696, %v2405
        %v2730 = vsel %vm2726, %v2697, %v2407
        %v2731 = vsel %vm2726, %v2698, %v2409
        %v2732 = vsel %vm2726, %v2699, %v2411
        %v2733 = vsel %vm2726, %v2700, %v2413
        %v2734 = vsel %vm2726, %v2701, %v2415
        %v2735 = vsel %vm2726, %v2702, %v2417
        %v2736 = vsel %vm2726, %v2703, %v2419
        %v2737 = vsel %vm2726, %v2704, %v2421
        %v2738 = vsel %vm2726, %v2705, %v2423
        %v2739 = vsel %vm2726, %v2706, %v2425
        %v2740 = vsel %vm2726, %v2707, %v2427
        %v2741 = vsel %vm2726, %v2708, %v2429
        %v2742 = vsel %vm2726, %v2709, %v2431
        %v2743 = vsel %vm2726, %v2710, %v2433
        %v2744 = vsel %vm2726, %v2711, %v2435
        %v2745 = vsel %vm2726, %v2712, %v2437
        %v2746 = vsel %vm2726, %v2713, %v2439
        %v2747 = vsel %vm2726, %v2714, %v2441
        %v2748 = vsel %vm2726, %v2715, %v2443
        %v2749 = vsel %vm2726, %v2716, %v2445
        %v2750 = vsel %vm2726, %v2717, %v2447
        %v2751 = vsel %vm2726, %v2718, %v2449
        %v2752 = vsel %vm2726, %v2719, %v2451
        %v2753 = vsel %vm2726, %v2720, %v2453
        %v2754 = vsel %vm2726, %v2721, %v2455
        %v2755 = vsel %vm2726, %v2722, %v2457
        %v2756 = vsel %vm2726, %v2723, %v2459
        %v2757 = vsel %vm2726, %v2724, %v2461
        %v2758 = vsel %vm2726, %v2725, %v2463
        %v2759 = vpack.c.bf16 %v2728, %v2727
        %v2760 = vpack.c.bf16 %v2730, %v2729
        %v2761 = vpack.c.bf16 %v2732, %v2731
        %v2762 = vpack.c.bf16 %v2734, %v2733
        %v2763 = vpack.c.bf16 %v2736, %v2735
        %v2764 = vpack.c.bf16 %v2738, %v2737
        %v2765 = vpack.c.bf16 %v2740, %v2739
        %v2766 = vpack.c.bf16 %v2742, %v2741
        %v2767 = vpack.c.bf16 %v2744, %v2743
        %v2768 = vpack.c.bf16 %v2746, %v2745
        %v2769 = vpack.c.bf16 %v2748, %v2747
        %v2770 = vpack.c.bf16 %v2750, %v2749
        %v2771 = vpack.c.bf16 %v2752, %v2751
        %v2772 = vpack.c.bf16 %v2754, %v2753
        %v2773 = vpack.c.bf16 %v2756, %v2755
        %v2774 = vpack.c.bf16 %v2758, %v2757
        %v2775 = vld [vmem:[%s2] sm:$0xf]
        %v2776 = vld [vmem:[%s2 + $0x4] sm:$0xf]
        %v2777 = vld [vmem:[%s2 + $0x8] sm:$0xf]
        %v2778 = vld [vmem:[%s2 + $0xc] sm:$0xf]
        %v2779 = vld [vmem:[%s2 + $0x10] sm:$0x3]
        %v2780 = vld [vmem:[%s5] sm:$0x1]
        %v2782 = vperm.slane %v2780, 0
        %v2789 = vunpack.c.l.b16 %v2775
        %v2790 = vunpack.c.l.b16 %v2776
        %v2791 = vunpack.c.l.b16 %v2777
        %v2792 = vunpack.c.l.b16 %v2778
        %v2793 = vunpack.c.l.b16 %v2779
        %v2794 = vpack.c.b16 %v2790, %v2789
        %v2795 = vpack.c.b16 %v2792, %v2791
        %v2796 = vpack.c.b16 %v2793, %v2793
        %vm2799 = vcmask 293888
        %v2801 = vsel %vm2799, %v2759, 0
        %v2804 = vsel %vm2799, %v2760, 0
        %v2807 = vsel %vm2799, %v2761, 0
        %v2810 = vsel %vm2799, %v2762, 0
        %v2813 = vsel %vm2799, %v2763, 0
        %v2816 = vsel %vm2799, %v2764, 0
        %v2819 = vsel %vm2799, %v2765, 0
        %v2822 = vsel %vm2799, %v2766, 0
        %v2825 = vsel %vm2799, %v2767, 0
        %v2828 = vsel %vm2799, %v2768, 0
        %v2831 = vsel %vm2799, %v2769, 0
        %v2834 = vsel %vm2799, %v2770, 0
        %v2837 = vsel %vm2799, %v2771, 0
        %v2840 = vsel %vm2799, %v2772, 0
        %v2843 = vsel %vm2799, %v2773, 0
        %v2846 = vsel %vm2799, %v2774, 0
        %vm2848 = vcmask 1041408
        %v2850 = vsel %vm2848, %v2796, 0
        %2852 = vmatpush.bf16.msra.mxu0 0
        %2853 = vmatpush.bf16.msra.mxu0 0
        %2854 = vmatpush.bf16.msra.mxu0 0
        %2855 = vmatpush.bf16.msra.mxu0 0
        %2856 = vmatpush.bf16.msra.mxu0 0
        %2857 = vmatpush.bf16.msra.mxu0 %v2850
        %2858 = vmatpush.bf16.msra.mxu0 %v2795
        %2859 = vmatpush.bf16.msra.mxu0 %v2794
        %2860 = vmatmul.bf16.gmra.mxu0 %v2801
        %v2861 = vpop.f32.mrf.mxu0
        %v2862 = vadd.f32 %v2782, %v2861
        %v2863 = vpop.f32.mrf.mxu0
        %v2864 = vadd.f32 %v2782, %v2863
        %2865 = vmatmul.bf16.gmra.mxu0 %v2804
        %v2866 = vpop.f32.mrf.mxu0
        %v2867 = vadd.f32 %v2782, %v2866
        %v2868 = vpop.f32.mrf.mxu0
        %v2869 = vadd.f32 %v2782, %v2868
        %2870 = vmatmul.bf16.gmra.mxu0 %v2807
        %v2871 = vpop.f32.mrf.mxu0
        %v2872 = vadd.f32 %v2782, %v2871
        %v2873 = vpop.f32.mrf.mxu0
        %v2874 = vadd.f32 %v2782, %v2873
        %2875 = vmatmul.bf16.gmra.mxu0 %v2810
        %v2876 = vpop.f32.mrf.mxu0
        %v2877 = vadd.f32 %v2782, %v2876
        %v2878 = vpop.f32.mrf.mxu0
        %v2879 = vadd.f32 %v2782, %v2878
        %2880 = vmatmul.bf16.gmra.mxu0 %v2813
        %v2881 = vpop.f32.mrf.mxu0
        %v2882 = vadd.f32 %v2782, %v2881
        %v2883 = vpop.f32.mrf.mxu0
        %v2884 = vadd.f32 %v2782, %v2883
        %2885 = vmatmul.bf16.gmra.mxu0 %v2816
        %v2886 = vpop.f32.mrf.mxu0
        %v2887 = vadd.f32 %v2782, %v2886
        %v2888 = vpop.f32.mrf.mxu0
        %v2889 = vadd.f32 %v2782, %v2888
        %2890 = vmatmul.bf16.gmra.mxu0 %v2819
        %v2891 = vpop.f32.mrf.mxu0
        %v2892 = vadd.f32 %v2782, %v2891
        %v2893 = vpop.f32.mrf.mxu0
        %v2894 = vadd.f32 %v2782, %v2893
        %2895 = vmatmul.bf16.gmra.mxu0 %v2822
        %v2896 = vpop.f32.mrf.mxu0
        %v2897 = vadd.f32 %v2782, %v2896
        %v2898 = vpop.f32.mrf.mxu0
        %v2899 = vadd.f32 %v2782, %v2898
        %2900 = vmatmul.bf16.gmra.mxu0 %v2825
        %v2901 = vpop.f32.mrf.mxu0
        %v2902 = vadd.f32 %v2782, %v2901
        %v2903 = vpop.f32.mrf.mxu0
        %v2904 = vadd.f32 %v2782, %v2903
        %2905 = vmatmul.bf16.gmra.mxu0 %v2828
        %v2906 = vpop.f32.mrf.mxu0
        %v2907 = vadd.f32 %v2782, %v2906
        %v2908 = vpop.f32.mrf.mxu0
        %v2909 = vadd.f32 %v2782, %v2908
        %2910 = vmatmul.bf16.gmra.mxu0 %v2831
        %v2911 = vpop.f32.mrf.mxu0
        %v2912 = vadd.f32 %v2782, %v2911
        %v2913 = vpop.f32.mrf.mxu0
        %v2914 = vadd.f32 %v2782, %v2913
        %2915 = vmatmul.bf16.gmra.mxu0 %v2834
        %v2916 = vpop.f32.mrf.mxu0
        %v2917 = vadd.f32 %v2782, %v2916
        %v2918 = vpop.f32.mrf.mxu0
        %v2919 = vadd.f32 %v2782, %v2918
        %2920 = vmatmul.bf16.gmra.mxu0 %v2837
        %v2921 = vpop.f32.mrf.mxu0
        %v2922 = vadd.f32 %v2782, %v2921
        %v2923 = vpop.f32.mrf.mxu0
        %v2924 = vadd.f32 %v2782, %v2923
        %2925 = vmatmul.bf16.gmra.mxu0 %v2840
        %v2926 = vpop.f32.mrf.mxu0
        %v2927 = vadd.f32 %v2782, %v2926
        %v2928 = vpop.f32.mrf.mxu0
        %v2929 = vadd.f32 %v2782, %v2928
        %2930 = vmatmul.bf16.gmra.mxu0 %v2843
        %v2931 = vpop.f32.mrf.mxu0
        %v2932 = vadd.f32 %v2782, %v2931
        %v2933 = vpop.f32.mrf.mxu0
        %v2934 = vadd.f32 %v2782, %v2933
        %2935 = vmatmul.bf16.gmra.mxu0 %v2846
        %v2936 = vpop.f32.mrf.mxu0
        %v2937 = vadd.f32 %v2782, %v2936
        %v2938 = vpop.f32.mrf.mxu0
        %v2939 = vadd.f32 %v2782, %v2938
        %2940 = vdwg.mxu0
        %v2941 = vmax.f32 %v2862, 0.0
        %v2942 = vmax.f32 %v2864, 0.0
        %v2943 = vmax.f32 %v2867, 0.0
        %v2944 = vmax.f32 %v2869, 0.0
        %v2945 = vmax.f32 %v2872, 0.0
        %v2946 = vmax.f32 %v2874, 0.0
        %v2947 = vmax.f32 %v2877, 0.0
        %v2948 = vmax.f32 %v2879, 0.0
        %v2949 = vmax.f32 %v2882, 0.0
        %v2950 = vmax.f32 %v2884, 0.0
        %v2951 = vmax.f32 %v2887, 0.0
        %v2952 = vmax.f32 %v2889, 0.0
        %v2953 = vmax.f32 %v2892, 0.0
        %v2954 = vmax.f32 %v2894, 0.0
        %v2955 = vmax.f32 %v2897, 0.0
        %v2956 = vmax.f32 %v2899, 0.0
        %v2957 = vmax.f32 %v2902, 0.0
        %v2958 = vmax.f32 %v2904, 0.0
        %v2959 = vmax.f32 %v2907, 0.0
        %v2960 = vmax.f32 %v2909, 0.0
        %v2961 = vmax.f32 %v2912, 0.0
        %v2962 = vmax.f32 %v2914, 0.0
        %v2963 = vmax.f32 %v2917, 0.0
        %v2964 = vmax.f32 %v2919, 0.0
        %v2965 = vmax.f32 %v2922, 0.0
        %v2966 = vmax.f32 %v2924, 0.0
        %v2967 = vmax.f32 %v2927, 0.0
        %v2968 = vmax.f32 %v2929, 0.0
        %v2969 = vmax.f32 %v2932, 0.0
        %v2970 = vmax.f32 %v2934, 0.0
        %v2971 = vmax.f32 %v2937, 0.0
        %v2972 = vmax.f32 %v2939, 0.0
        %v2973 = vpack.c.bf16 %v2942, %v2941
        %v2974 = vpack.c.bf16 %v2944, %v2943
        %v2975 = vpack.c.bf16 %v2946, %v2945
        %v2976 = vpack.c.bf16 %v2948, %v2947
        %v2977 = vpack.c.bf16 %v2950, %v2949
        %v2978 = vpack.c.bf16 %v2952, %v2951
        %v2979 = vpack.c.bf16 %v2954, %v2953
        %v2980 = vpack.c.bf16 %v2956, %v2955
        %v2981 = vpack.c.bf16 %v2958, %v2957
        %v2982 = vpack.c.bf16 %v2960, %v2959
        %v2983 = vpack.c.bf16 %v2962, %v2961
        %v2984 = vpack.c.bf16 %v2964, %v2963
        %v2985 = vpack.c.bf16 %v2966, %v2965
        %v2986 = vpack.c.bf16 %v2968, %v2967
        %v2987 = vpack.c.bf16 %v2970, %v2969
        %v2988 = vpack.c.bf16 %v2972, %v2971
        %v2989 = vld [vmem:[%s3] sm:$0x3]
        %v2990 = vld [vmem:[%s6] sm:$0x1]
        %v2992 = vperm.slane %v2990, 0
        %v2995 = vsel %vm2496, %v2973, 0
        %v2998 = vsel %vm2496, %v2974, 0
        %v3001 = vsel %vm2496, %v2975, 0
        %v3004 = vsel %vm2496, %v2976, 0
        %v3007 = vsel %vm2496, %v2977, 0
        %v3010 = vsel %vm2496, %v2978, 0
        %v3013 = vsel %vm2496, %v2979, 0
        %v3016 = vsel %vm2496, %v2980, 0
        %v3019 = vsel %vm2496, %v2981, 0
        %v3022 = vsel %vm2496, %v2982, 0
        %v3025 = vsel %vm2496, %v2983, 0
        %v3028 = vsel %vm2496, %v2984, 0
        %v3031 = vsel %vm2496, %v2985, 0
        %v3034 = vsel %vm2496, %v2986, 0
        %v3037 = vsel %vm2496, %v2987, 0
        %v3040 = vsel %vm2496, %v2988, 0
        %v3043 = vsel %vm2848, %v2989, 0
        %3045 = vmatpush.bf16.msra.mxu0 0
        %3046 = vmatpush.bf16.msra.mxu0 0
        %3047 = vmatpush.bf16.msra.mxu0 0
        %3048 = vmatpush.bf16.msra.mxu0 0
        %3049 = vmatpush.bf16.msra.mxu0 0
        %3050 = vmatpush.bf16.msra.mxu0 0
        %3051 = vmatpush.bf16.msra.mxu0 0
        %3052 = vmatpush.bf16.msra.mxu0 %v3043
        %3053 = vmatmul.bf16.gmra.mxu0 %v2995
        %v3054 = vpop.f32.mrf.mxu0
        %v3055 = vadd.f32 %v2992, %v3054
        %v3056 = vpop.f32.mrf.mxu0
        %v3057 = vadd.f32 %v2992, %v3056
        %3058 = vmatmul.bf16.gmra.mxu0 %v2998
        %v3059 = vpop.f32.mrf.mxu0
        %v3060 = vadd.f32 %v2992, %v3059
        %v3061 = vpop.f32.mrf.mxu0
        %v3062 = vadd.f32 %v2992, %v3061
        %3063 = vmatmul.bf16.gmra.mxu0 %v3001
        %v3064 = vpop.f32.mrf.mxu0
        %v3065 = vadd.f32 %v2992, %v3064
        %v3066 = vpop.f32.mrf.mxu0
        %v3067 = vadd.f32 %v2992, %v3066
        %3068 = vmatmul.bf16.gmra.mxu0 %v3004
        %v3069 = vpop.f32.mrf.mxu0
        %v3070 = vadd.f32 %v2992, %v3069
        %v3071 = vpop.f32.mrf.mxu0
        %v3072 = vadd.f32 %v2992, %v3071
        %3073 = vmatmul.bf16.gmra.mxu0 %v3007
        %v3074 = vpop.f32.mrf.mxu0
        %v3075 = vadd.f32 %v2992, %v3074
        %v3076 = vpop.f32.mrf.mxu0
        %v3077 = vadd.f32 %v2992, %v3076
        %3078 = vmatmul.bf16.gmra.mxu0 %v3010
        %v3079 = vpop.f32.mrf.mxu0
        %v3080 = vadd.f32 %v2992, %v3079
        %v3081 = vpop.f32.mrf.mxu0
        %v3082 = vadd.f32 %v2992, %v3081
        %3083 = vmatmul.bf16.gmra.mxu0 %v3013
        %v3084 = vpop.f32.mrf.mxu0
        %v3085 = vadd.f32 %v2992, %v3084
        %v3086 = vpop.f32.mrf.mxu0
        %v3087 = vadd.f32 %v2992, %v3086
        %3088 = vmatmul.bf16.gmra.mxu0 %v3016
        %v3089 = vpop.f32.mrf.mxu0
        %v3090 = vadd.f32 %v2992, %v3089
        %v3091 = vpop.f32.mrf.mxu0
        %v3092 = vadd.f32 %v2992, %v3091
        %3093 = vmatmul.bf16.gmra.mxu0 %v3019
        %v3094 = vpop.f32.mrf.mxu0
        %v3095 = vadd.f32 %v2992, %v3094
        %v3096 = vpop.f32.mrf.mxu0
        %v3097 = vadd.f32 %v2992, %v3096
        %3098 = vmatmul.bf16.gmra.mxu0 %v3022
        %v3099 = vpop.f32.mrf.mxu0
        %v3100 = vadd.f32 %v2992, %v3099
        %v3101 = vpop.f32.mrf.mxu0
        %v3102 = vadd.f32 %v2992, %v3101
        %3103 = vmatmul.bf16.gmra.mxu0 %v3025
        %v3104 = vpop.f32.mrf.mxu0
        %v3105 = vadd.f32 %v2992, %v3104
        %v3106 = vpop.f32.mrf.mxu0
        %v3107 = vadd.f32 %v2992, %v3106
        %3108 = vmatmul.bf16.gmra.mxu0 %v3028
        %v3109 = vpop.f32.mrf.mxu0
        %v3110 = vadd.f32 %v2992, %v3109
        %v3111 = vpop.f32.mrf.mxu0
        %v3112 = vadd.f32 %v2992, %v3111
        %3113 = vmatmul.bf16.gmra.mxu0 %v3031
        %v3114 = vpop.f32.mrf.mxu0
        %v3115 = vadd.f32 %v2992, %v3114
        %v3116 = vpop.f32.mrf.mxu0
        %v3117 = vadd.f32 %v2992, %v3116
        %3118 = vmatmul.bf16.gmra.mxu0 %v3034
        %v3119 = vpop.f32.mrf.mxu0
        %v3120 = vadd.f32 %v2992, %v3119
        %v3121 = vpop.f32.mrf.mxu0
        %v3122 = vadd.f32 %v2992, %v3121
        %3123 = vmatmul.bf16.gmra.mxu0 %v3037
        %v3124 = vpop.f32.mrf.mxu0
        %v3125 = vadd.f32 %v2992, %v3124
        %v3126 = vpop.f32.mrf.mxu0
        %v3127 = vadd.f32 %v2992, %v3126
        %3128 = vmatmul.bf16.gmra.mxu0 %v3040
        %v3129 = vpop.f32.mrf.mxu0
        %v3130 = vadd.f32 %v2992, %v3129
        %v3131 = vpop.f32.mrf.mxu0
        %v3132 = vadd.f32 %v2992, %v3131
        %3133 = vdwg.mxu0
        %3136 = vrot.lane.b32.xlu0 %v3060, 16
        %v3137 = vpop.permute.xlu0 %3136
        %3138 = vrot.lane.b32.xlu0 %v3062, 16
        %v3139 = vpop.permute.xlu0 %3138
        %3144 = vrot.lane.b32.xlu0 %v3065, 32
        %v3145 = vpop.permute.xlu0 %3144
        %3146 = vrot.lane.b32.xlu0 %v3067, 32
        %v3147 = vpop.permute.xlu0 %3146
        %3152 = vrot.lane.b32.xlu0 %v3070, 48
        %v3153 = vpop.permute.xlu0 %3152
        %3154 = vrot.lane.b32.xlu0 %v3072, 48
        %v3155 = vpop.permute.xlu0 %3154
        %3160 = vrot.lane.b32.xlu0 %v3075, 64
        %v3161 = vpop.permute.xlu0 %3160
        %3162 = vrot.lane.b32.xlu0 %v3077, 64
        %v3163 = vpop.permute.xlu0 %3162
        %3168 = vrot.lane.b32.xlu0 %v3080, 80
        %v3169 = vpop.permute.xlu0 %3168
        %3170 = vrot.lane.b32.xlu0 %v3082, 80
        %v3171 = vpop.permute.xlu0 %3170
        %3176 = vrot.lane.b32.xlu0 %v3085, 96
        %v3177 = vpop.permute.xlu0 %3176
        %3178 = vrot.lane.b32.xlu0 %v3087, 96
        %v3179 = vpop.permute.xlu0 %3178
        %3184 = vrot.lane.b32.xlu0 %v3090, 112
        %v3185 = vpop.permute.xlu0 %3184
        %3186 = vrot.lane.b32.xlu0 %v3092, 112
        %v3187 = vpop.permute.xlu0 %3186
        %3192 = vrot.lane.b32.xlu0 %v3100, 16
        %v3193 = vpop.permute.xlu0 %3192
        %3194 = vrot.lane.b32.xlu0 %v3102, 16
        %v3195 = vpop.permute.xlu0 %3194
        %3200 = vrot.lane.b32.xlu0 %v3105, 32
        %v3201 = vpop.permute.xlu0 %3200
        %3202 = vrot.lane.b32.xlu0 %v3107, 32
        %v3203 = vpop.permute.xlu0 %3202
        %3208 = vrot.lane.b32.xlu0 %v3110, 48
        %v3209 = vpop.permute.xlu0 %3208
        %3210 = vrot.lane.b32.xlu0 %v3112, 48
        %v3211 = vpop.permute.xlu0 %3210
        %3216 = vrot.lane.b32.xlu0 %v3115, 64
        %v3217 = vpop.permute.xlu0 %3216
        %3218 = vrot.lane.b32.xlu0 %v3117, 64
        %v3219 = vpop.permute.xlu0 %3218
        %3224 = vrot.lane.b32.xlu0 %v3120, 80
        %v3225 = vpop.permute.xlu0 %3224
        %3226 = vrot.lane.b32.xlu0 %v3122, 80
        %v3227 = vpop.permute.xlu0 %3226
        %3232 = vrot.lane.b32.xlu0 %v3125, 96
        %v3233 = vpop.permute.xlu0 %3232
        %3234 = vrot.lane.b32.xlu0 %v3127, 96
        %v3235 = vpop.permute.xlu0 %3234
        %3240 = vrot.lane.b32.xlu0 %v3130, 112
        %v3241 = vpop.permute.xlu0 %3240
        %3242 = vrot.lane.b32.xlu0 %v3132, 112
        %v3243 = vpop.permute.xlu0 %3242
        %v3246 = vsel %vm420, %v3055, %v3137
        %v3247 = vsel %vm420, %v3057, %v3139
        %v3248 = vsel %vm2726, %v3246, %v3145
        %v3249 = vsel %vm2726, %v3247, %v3147
        %vm3250 = vcmask 392192
        %v3251 = vsel %vm3250, %v3248, %v3153
        %v3252 = vsel %vm3250, %v3249, %v3155
        %vm3253 = vcmask 523264
        %v3254 = vsel %vm3253, %v3251, %v3161
        %v3255 = vsel %vm3253, %v3252, %v3163
        %vm3256 = vcmask 654336
        %v3257 = vsel %vm3256, %v3254, %v3169
        %v3258 = vsel %vm3256, %v3255, %v3171
        %vm3259 = vcmask 785408
        %v3260 = vsel %vm3259, %v3257, %v3177
        %v3261 = vsel %vm3259, %v3258, %v3179
        %vm3262 = vcmask 916480
        %v3263 = vsel %vm3262, %v3260, %v3185
        %v3264 = vsel %vm3262, %v3261, %v3187
        %v3265 = vsel %vm420, %v3095, %v3193
        %v3266 = vsel %vm420, %v3097, %v3195
        %v3267 = vsel %vm2726, %v3265, %v3201
        %v3268 = vsel %vm2726, %v3266, %v3203
        %v3269 = vsel %vm3250, %v3267, %v3209
        %v3270 = vsel %vm3250, %v3268, %v3211
        %v3271 = vsel %vm3253, %v3269, %v3217
        %v3272 = vsel %vm3253, %v3270, %v3219
        %v3273 = vsel %vm3256, %v3271, %v3225
        %v3274 = vsel %vm3256, %v3272, %v3227
        %v3275 = vsel %vm3259, %v3273, %v3233
        %v3276 = vsel %vm3259, %v3274, %v3235
        %v3277 = vsel %vm3262, %v3275, %v3241
        %v3278 = vsel %vm3262, %v3276, %v3243
        %v3279 = vadd.f32 %v3263, %v300
        %v3280 = vadd.f32 %v3277, %v301
        %v3281 = vadd.f32 %v3264, %v302
        %v3282 = vadd.f32 %v3278, %v303
        %v3283 = vmax.f32 %v3279, 0.0
        %v3284 = vmax.f32 %v3280, 0.0
        %v3285 = vmax.f32 %v3281, 0.0
        %v3286 = vmax.f32 %v3282, 0.0
        %3287 = vst [vmem:[%s298] sm:$0xff] %v3283
        %3288 = vst [vmem:[%s298 + $0x8] sm:$0xff] %v3284
        %3289 = vst [vmem:[%s298 + $0x10] sm:$0xff] %v3285
        %3290 = vst [vmem:[%s298 + $0x18] sm:$0xff] %v3286
        %s3291 = sand.u32 %s184, 1
        %s3292 = scalar_lea.sflag [#allocation4], %s3291
        %s3293 = sand.u32 %s184, 1
        %s3294 = smul.addr %s3293, 32
        %s3295 = scalar_lea.vmem [#allocation5], %s3294
        // Predicated region
        $region53: #{tpu_custom_call.1} parent=47 // pred_check
          %p3296 = pneg %p194
        $region54: #{tpu_custom_call.1} parent=47 // pred_check_branch
          %3298 = sbr.rel (%p3296) target = $region56
        $region55: #{tpu_custom_call.1} parent=47 // pred_region
          %3300 = vsyncadd %s3292, 0
          %s3301 = smul.addr %s24, 4
          %s3302 = smul.addr %s3301, 8
          %s3303 = scalar_lea.hbm %s7, %s3302
          %s3304 = sshll.u32 %s3295, 4
          %s3305 = int_to_ptr.vmem [resolvable:$true] %s3304
          %s3306 = sshll.u32 %s3303, 4
          %s3307 = int_to_ptr.hbm [resolvable:$true] %s3306
          %3312 = dma.vmem_to_hbm [thread:$0]  %s3305, 512, %s3307, %s3292, 256, 256, 16
        $region56: #{tpu_custom_call.1} parent=47 // pred_fallthru
          _
      $region48: #{tpu_custom_call.1} parent=5 // pred_fallthru
        _
      %p3313 = scmp.le.s32.totalorder 2, %s19
      // Predicated region
      $region57: #{tpu_custom_call.1} parent=5 // pred_check
        %p3314 = pneg %p3313
      $region58: #{tpu_custom_call.1} parent=5 // pred_check_branch
        %3316 = sbr.rel (%p3314) target = $region60
      $region59: #{tpu_custom_call.1} parent=5 // pred_region
        %s3317 = ssub.s32 %s19, 2
        // Predicated region
        $region61: #{tpu_custom_call.1} parent=59 // pred_check
          %p3318 = pneg %p200
        $region62: #{tpu_custom_call.1} parent=59 // pred_check_branch
          %3320 = sbr.rel (%p3318) target = $region64
        $region63: #{tpu_custom_call.1} parent=59 // pred_region
          %s3321 = sand.u32 %s185, 1
          %s3322 = scalar_lea.sflag [#allocation4], %s3321
          %s3323 = sand.u32 %s185, 1
          %s3324 = smul.addr %s3323, 32
          %s3325 = scalar_lea.vmem [#allocation5], %s3324
          %3327 = dma.done %s3322, 512
        $region64: #{tpu_custom_call.1} parent=59 // pred_fallthru
          _
      $region60: #{tpu_custom_call.1} parent=5 // pred_fallthru
        _
    $region6: #{tpu_custom_call.1} parent=1 // loop_footer
      %s23 = sadd.s32 1, %s19
    $region7: #{tpu_custom_call.1} parent=1 // loop_footer_branch
      %18 = sbr.rel target = $region3
    $region8: #{tpu_custom_call.1} parent=1 // loop_exit
      _
    %3328 = vsyncpa [#allocation3], 1
    %s3329 = scalar_lea.sflag [#allocation3], 1
    %3330 = vsyncpa %s3329, 1
    %3331 = vsyncpa [#allocation4], 1
    %s3332 = scalar_lea.sflag [#allocation4], 1
    %3333 = vsyncpa %s3332, 1

</llo_original>
